<compile_context>
chip_gen: v7x
topology: tpu7x:2x2x1
jax: 0.10.0
libtpu: 0.0.40
codegen_flags: <defaults>
</compile_context>

<pallas_src>
import functools

import jax
import jax.numpy as jnp
from jax.experimental import pallas as pl
from jax.experimental.pallas import tpu as pltpu


def _round_up(a: int, b: int) -> int:
    return (a + b - 1) // b * b


def upconv_phase_kernel(x_ref, w_ref, sh_ref, o_ref, *, w2, cin, l_tile):
    """Fused phase-decomposed (upsample+conv) + folded BN + ReLU.

    x_ref  : (Cin, in_len)       flattened zero-padded input plane (lane-dense)
    w_ref  : (Cout, 16*Cin)      BN-scale-folded 2x2 phase weights, col = k*Cin + ci,
                                 k = ((a*2 + b)*2 + dh)*2 + dw
    sh_ref : (Cout, 1)           folded per-channel shift (bias/BN)
    o_ref  : (4*Cout, out_len)   out[p*Cout + co, i*w2 + j] = y[co, 2i+a, 2j+b], p = a*2+b
    """
    co_blk = sh_ref.shape[0]
    out_len = o_ref.shape[-1]
    s_pad = x_ref.shape[-1] - out_len          # lane headroom covering the largest tap shift

    w = w_ref[...]                             # (Cout, 16*Cin)  -- one padded tile, loaded once
    sh = sh_ref[...]                           # (Cout, 1)

    # In-kernel L tiling keeps the tap working set bounded at large H/W.
    for l0 in range(0, out_len, l_tile):
        cur = min(l_tile, out_len - l0)                     # multiple of 128
        xw = x_ref[:, l0:l0 + cur + s_pad]                  # aligned window load (Cin, cur+s_pad)

        # 9 statically shifted lane windows:
        # taps[(rs, cs)][ci, i*w2 + j] = x_pad[ci, i + rs, j + cs]
        taps = {}
        for rs in range(3):
            for cs in range(3):
                s = rs * w2 + cs
                taps[(rs, cs)] = xw[:, s:s + cur]           # (Cin, cur)

        # Phase-aggregated 2x2 convolutions; Cout lives on sublanes of the accumulator.
        for p, (a, b) in enumerate(((0, 0), (0, 1), (1, 0), (1, 1))):
            acc = None
            for dh in range(2):
                for dw in range(2):
                    t = taps[(a + dh, b + dw)]
                    k = (p * 2 + dh) * 2 + dw
                    for ci in range(cin):
                        col = w[:, k * cin + ci:k * cin + ci + 1]   # (Cout, 1)
                        term = col * t[ci:ci + 1, :]                # (Cout, cur)
                        acc = term if acc is None else acc + term
            # Sublane-dense slab store: full (Cout, cur) tile, lane-aligned offsets.
            o_ref[p * co_blk:(p + 1) * co_blk, l0:l0 + cur] = jnp.maximum(acc + sh, 0.0)


def upconv_forward(x_nchw, conv_w, conv_b, gamma, beta, run_mean, run_var,
                   eps=1e-5, l_tile=512):
    """x_nchw: (N, Cin, H, W) f32 -> (N, Cout, 2H, 2W) f32."""
    N, Cin, H, W = x_nchw.shape
    Cout = conv_w.shape[0]
    w2 = W + 2
    flat = (H + 2) * w2                        # flattened padded-plane length
    out_len = _round_up(flat, 128)             # lane-dense compute/output length
    s_max = 2 * w2 + 2                         # largest flat tap shift
    s_pad = _round_up(s_max, 128)              # lane-aligned shift headroom
    in_len = out_len + s_pad

    # ---- BN (eval mode) folding + phase-aggregated 2x2 weights (plain JAX glue) ----
    # TODO(synk): PyTorch's default (train-mode) BatchNorm2d uses batch statistics; here
    # eval-mode BN (running stats) is folded into a per-channel scale/shift.
    scale = gamma / jnp.sqrt(run_var + eps)                        # (Cout,)
    shift = (conv_b - run_mean) * scale + beta                     # (Cout,)
    wf = conv_w.astype(jnp.float32) * scale[:, None, None, None]   # scale folded into W

    # kh (resp. kw) groups contributing to tap dh (resp. dw) for row (col) phase a (b).
    groups = (((0,), (1, 2)), ((0, 1), (2,)))
    cols = []
    for a in range(2):
        for b in range(2):
            for dh in range(2):
                for dw in range(2):
                    m = 0.0
                    for kh in groups[a][dh]:
                        for kw in groups[b][dw]:
                            m = m + wf[:, :, kh, kw]
                    cols.append(m)                                  # (Cout, Cin)
    w_packed = jnp.concatenate(cols, axis=1).astype(jnp.float32)    # (Cout, 16*Cin)
    sh_packed = shift.reshape(Cout, 1).astype(jnp.float32)          # (Cout, 1)

    # ---- flattened, zero-padded input plane (no materialized x2 upsample) ----
    x_pad = jnp.pad(x_nchw.astype(jnp.float32), ((0, 0), (0, 0), (1, 1), (1, 1)))
    x_flat = x_pad.reshape(N, Cin, flat)
    x_flat = jnp.pad(x_flat, ((0, 0), (0, 0), (0, in_len - flat)))  # zero tail

    kernel = functools.partial(upconv_phase_kernel, w2=w2, cin=Cin, l_tile=l_tile)
    out = pl.pallas_call(
        kernel,
        out_shape=jax.ShapeDtypeStruct((N, 4 * Cout, out_len), jnp.float32),
        grid=(N,),
        in_specs=[
            pl.BlockSpec((None, Cin, in_len), lambda n: (n, 0, 0)),
            pl.BlockSpec((Cout, 16 * Cin), lambda n: (0, 0)),
            pl.BlockSpec((Cout, 1), lambda n: (0, 0)),
        ],
        out_specs=pl.BlockSpec((None, 4 * Cout, out_len), lambda n: (n, 0, 0)),
        compiler_params=pltpu.CompilerParams(dimension_semantics=("parallel",)),
    )(x_flat, w_packed, sh_packed)

    # ---- untangle phases: (n, (a*2+b)*Cout + co, i*w2 + j) -> NCHW (n, co, 2i+a, 2j+b) ----
    y = out.reshape(N, 2, 2, Cout, out_len)[..., :flat]
    y = y.reshape(N, 2, 2, Cout, H + 2, w2)[..., :H, :W]   # (n, a, b, co, i, j)
    y = jnp.transpose(y, (0, 3, 4, 1, 5, 2))               # (n, co, i, a, j, b)
    return y.reshape(N, Cout, 2 * H, 2 * W)


def upconv_reference(x, conv_w, conv_b, gamma, beta, run_mean, run_var, eps=1e-5):
    """Pure-JAX reference (nearest x2 upsample -> conv -> eval BN -> ReLU)."""
    xu = jnp.repeat(jnp.repeat(x, 2, axis=2), 2, axis=3)
    y = jax.lax.conv_general_dilated(
        xu, conv_w, window_strides=(1, 1), padding=((1, 1), (1, 1)),
        dimension_numbers=("NCHW", "OIHW", "NCHW"),
        precision=jax.lax.Precision.HIGHEST)
    y = y + conv_b[None, :, None, None]
    y = (y - run_mean[None, :, None, None]) * (
        gamma[None, :, None, None] / jnp.sqrt(run_var[None, :, None, None] + eps))
    y = y + beta[None, :, None, None]
    return jnp.maximum(y, 0.0)


if __name__ == "__main__":
    in_channels, out_channels = 4, 8
    N, H, W = 2, 16, 16

    key = jax.random.PRNGKey(0)
    k_x, k_w, k_b, k_g, k_be, k_m, k_v = jax.random.split(key, 7)

    x = jax.random.normal(k_x, (N, in_channels, H, W), dtype=jnp.float32)
    conv_w = 0.1 * jax.random.normal(
        k_w, (out_channels, in_channels, 3, 3), dtype=jnp.float32)
    conv_b = 0.05 * jax.random.normal(k_b, (out_channels,), dtype=jnp.float32)
    gamma = 1.0 + 0.1 * jax.random.normal(k_g, (out_channels,), dtype=jnp.float32)
    beta = 0.1 * jax.random.normal(k_be, (out_channels,), dtype=jnp.float32)
    run_mean = 0.1 * jax.random.normal(k_m, (out_channels,), dtype=jnp.float32)
    run_var = jnp.abs(
        1.0 + 0.1 * jax.random.normal(k_v, (out_channels,), dtype=jnp.float32))

    out = upconv_forward(x, conv_w, conv_b, gamma, beta, run_mean, run_var)
    jax.block_until_ready(out)

    assert out.shape == (N, out_channels, 2 * H, 2 * W), out.shape
    assert bool(jnp.all(out >= 0.0))  # ReLU sanity

    ref = upconv_reference(x, conv_w, conv_b, gamma, beta, run_mean, run_var)
    max_err = float(jnp.max(jnp.abs(out - ref)))
    assert max_err < 5e-5, f"max abs err vs reference: {max_err}"

    print("KERNEL_OK")
</pallas_src>

<mosaic_0001>
module attributes {stable_mosaic.version = 11 : i64} {
  func.func @upconv_phase_kernel(%arg0: i32, %arg1: memref<1x4x512xf32, #tpu.memory_space<vmem>>, %arg2: memref<8x64xf32, #tpu.memory_space<vmem>>, %arg3: memref<8x1xf32, #tpu.memory_space<vmem>>, %arg4: memref<1x32x384xf32, #tpu.memory_space<vmem>>) attributes {dimension_semantics = [#tpu.dimension_semantics<parallel>], iteration_bounds = array<i64: 2>, scalar_prefetch = 0 : i64, scratch_operands = 0 : i64, tpu.core_type = #tpu.core_type<tc>, window_params = [{transform_indices = @transform_0, window_bounds = array<i64: 1, 4, 512>}, {pipeline_mode = #tpu.pipeline_mode<synchronous>, transform_indices = @transform_1, window_bounds = array<i64: 8, 64>}, {pipeline_mode = #tpu.pipeline_mode<synchronous>, transform_indices = @transform_2, window_bounds = array<i64: 8, 1>}, {transform_indices = @transform_3, window_bounds = array<i64: 1, 32, 384>}]} {
    %c0 = arith.constant 0 : index
    %c0_0 = arith.constant 0 : index
    %0 = vector.load %arg2[%c0, %c0_0] : memref<8x64xf32, #tpu.memory_space<vmem>>, vector<8x64xf32>
    %c0_1 = arith.constant 0 : index
    %c0_2 = arith.constant 0 : index
    %1 = vector.load %arg3[%c0_1, %c0_2] : memref<8x1xf32, #tpu.memory_space<vmem>>, vector<8x1xf32>
    %c0_3 = arith.constant 0 : index
    %c0_4 = arith.constant 0 : index
    %c0_5 = arith.constant 0 : index
    %2 = vector.load %arg1[%c0_3, %c0_4, %c0_5] : memref<1x4x512xf32, #tpu.memory_space<vmem>>, vector<1x4x512xf32>
    %3 = vector.shape_cast %2 : vector<1x4x512xf32> to vector<4x512xf32>
    %4 = vector.extract_strided_slice %3 {offsets = [0, 0], sizes = [4, 384], strides = [1, 1]} : vector<4x512xf32> to vector<4x384xf32>
    %5 = vector.extract_strided_slice %3 {offsets = [0, 1], sizes = [4, 384], strides = [1, 1]} : vector<4x512xf32> to vector<4x384xf32>
    %6 = vector.extract_strided_slice %3 {offsets = [0, 2], sizes = [4, 384], strides = [1, 1]} : vector<4x512xf32> to vector<4x384xf32>
    %7 = vector.extract_strided_slice %3 {offsets = [0, 18], sizes = [4, 384], strides = [1, 1]} : vector<4x512xf32> to vector<4x384xf32>
    %8 = vector.extract_strided_slice %3 {offsets = [0, 19], sizes = [4, 384], strides = [1, 1]} : vector<4x512xf32> to vector<4x384xf32>
    %9 = vector.extract_strided_slice %3 {offsets = [0, 20], sizes = [4, 384], strides = [1, 1]} : vector<4x512xf32> to vector<4x384xf32>
    %10 = vector.extract_strided_slice %3 {offsets = [0, 36], sizes = [4, 384], strides = [1, 1]} : vector<4x512xf32> to vector<4x384xf32>
    %11 = vector.extract_strided_slice %3 {offsets = [0, 37], sizes = [4, 384], strides = [1, 1]} : vector<4x512xf32> to vector<4x384xf32>
    %12 = vector.extract_strided_slice %3 {offsets = [0, 38], sizes = [4, 384], strides = [1, 1]} : vector<4x512xf32> to vector<4x384xf32>
    %13 = vector.extract_strided_slice %0 {offsets = [0, 0], sizes = [8, 1], strides = [1, 1]} : vector<8x64xf32> to vector<8x1xf32>
    %14 = vector.extract_strided_slice %4 {offsets = [0, 0], sizes = [1, 384], strides = [1, 1]} : vector<4x384xf32> to vector<1x384xf32>
    %15 = vector.broadcast %13 : vector<8x1xf32> to vector<8x384xf32>
    %16 = vector.broadcast %14 : vector<1x384xf32> to vector<8x384xf32>
    %17 = arith.mulf %15, %16 : vector<8x384xf32>
    %18 = vector.extract_strided_slice %0 {offsets = [0, 1], sizes = [8, 1], strides = [1, 1]} : vector<8x64xf32> to vector<8x1xf32>
    %19 = vector.extract_strided_slice %4 {offsets = [1, 0], sizes = [1, 384], strides = [1, 1]} : vector<4x384xf32> to vector<1x384xf32>
    %20 = vector.broadcast %18 : vector<8x1xf32> to vector<8x384xf32>
    %21 = vector.broadcast %19 : vector<1x384xf32> to vector<8x384xf32>
    %22 = arith.mulf %20, %21 : vector<8x384xf32>
    %23 = arith.addf %17, %22 : vector<8x384xf32>
    %24 = vector.extract_strided_slice %0 {offsets = [0, 2], sizes = [8, 1], strides = [1, 1]} : vector<8x64xf32> to vector<8x1xf32>
    %25 = vector.extract_strided_slice %4 {offsets = [2, 0], sizes = [1, 384], strides = [1, 1]} : vector<4x384xf32> to vector<1x384xf32>
    %26 = vector.broadcast %24 : vector<8x1xf32> to vector<8x384xf32>
    %27 = vector.broadcast %25 : vector<1x384xf32> to vector<8x384xf32>
    %28 = arith.mulf %26, %27 : vector<8x384xf32>
    %29 = arith.addf %23, %28 : vector<8x384xf32>
    %30 = vector.extract_strided_slice %0 {offsets = [0, 3], sizes = [8, 1], strides = [1, 1]} : vector<8x64xf32> to vector<8x1xf32>
    %31 = vector.extract_strided_slice %4 {offsets = [3, 0], sizes = [1, 384], strides = [1, 1]} : vector<4x384xf32> to vector<1x384xf32>
    %32 = vector.broadcast %30 : vector<8x1xf32> to vector<8x384xf32>
    %33 = vector.broadcast %31 : vector<1x384xf32> to vector<8x384xf32>
    %34 = arith.mulf %32, %33 : vector<8x384xf32>
    %35 = arith.addf %29, %34 : vector<8x384xf32>
    %36 = vector.extract_strided_slice %0 {offsets = [0, 4], sizes = [8, 1], strides = [1, 1]} : vector<8x64xf32> to vector<8x1xf32>
    %37 = vector.extract_strided_slice %5 {offsets = [0, 0], sizes = [1, 384], strides = [1, 1]} : vector<4x384xf32> to vector<1x384xf32>
    %38 = vector.broadcast %36 : vector<8x1xf32> to vector<8x384xf32>
    %39 = vector.broadcast %37 : vector<1x384xf32> to vector<8x384xf32>
    %40 = arith.mulf %38, %39 : vector<8x384xf32>
    %41 = arith.addf %35, %40 : vector<8x384xf32>
    %42 = vector.extract_strided_slice %0 {offsets = [0, 5], sizes = [8, 1], strides = [1, 1]} : vector<8x64xf32> to vector<8x1xf32>
    %43 = vector.extract_strided_slice %5 {offsets = [1, 0], sizes = [1, 384], strides = [1, 1]} : vector<4x384xf32> to vector<1x384xf32>
    %44 = vector.broadcast %42 : vector<8x1xf32> to vector<8x384xf32>
    %45 = vector.broadcast %43 : vector<1x384xf32> to vector<8x384xf32>
    %46 = arith.mulf %44, %45 : vector<8x384xf32>
    %47 = arith.addf %41, %46 : vector<8x384xf32>
    %48 = vector.extract_strided_slice %0 {offsets = [0, 6], sizes = [8, 1], strides = [1, 1]} : vector<8x64xf32> to vector<8x1xf32>
    %49 = vector.extract_strided_slice %5 {offsets = [2, 0], sizes = [1, 384], strides = [1, 1]} : vector<4x384xf32> to vector<1x384xf32>
    %50 = vector.broadcast %48 : vector<8x1xf32> to vector<8x384xf32>
    %51 = vector.broadcast %49 : vector<1x384xf32> to vector<8x384xf32>
    %52 = arith.mulf %50, %51 : vector<8x384xf32>
    %53 = arith.addf %47, %52 : vector<8x384xf32>
    %54 = vector.extract_strided_slice %0 {offsets = [0, 7], sizes = [8, 1], strides = [1, 1]} : vector<8x64xf32> to vector<8x1xf32>
    %55 = vector.extract_strided_slice %5 {offsets = [3, 0], sizes = [1, 384], strides = [1, 1]} : vector<4x384xf32> to vector<1x384xf32>
    %56 = vector.broadcast %54 : vector<8x1xf32> to vector<8x384xf32>
    %57 = vector.broadcast %55 : vector<1x384xf32> to vector<8x384xf32>
    %58 = arith.mulf %56, %57 : vector<8x384xf32>
    %59 = arith.addf %53, %58 : vector<8x384xf32>
    %60 = vector.extract_strided_slice %0 {offsets = [0, 8], sizes = [8, 1], strides = [1, 1]} : vector<8x64xf32> to vector<8x1xf32>
    %61 = vector.extract_strided_slice %7 {offsets = [0, 0], sizes = [1, 384], strides = [1, 1]} : vector<4x384xf32> to vector<1x384xf32>
    %62 = vector.broadcast %60 : vector<8x1xf32> to vector<8x384xf32>
    %63 = vector.broadcast %61 : vector<1x384xf32> to vector<8x384xf32>
    %64 = arith.mulf %62, %63 : vector<8x384xf32>
    %65 = arith.addf %59, %64 : vector<8x384xf32>
    %66 = vector.extract_strided_slice %0 {offsets = [0, 9], sizes = [8, 1], strides = [1, 1]} : vector<8x64xf32> to vector<8x1xf32>
    %67 = vector.extract_strided_slice %7 {offsets = [1, 0], sizes = [1, 384], strides = [1, 1]} : vector<4x384xf32> to vector<1x384xf32>
    %68 = vector.broadcast %66 : vector<8x1xf32> to vector<8x384xf32>
    %69 = vector.broadcast %67 : vector<1x384xf32> to vector<8x384xf32>
    %70 = arith.mulf %68, %69 : vector<8x384xf32>
    %71 = arith.addf %65, %70 : vector<8x384xf32>
    %72 = vector.extract_strided_slice %0 {offsets = [0, 10], sizes = [8, 1], strides = [1, 1]} : vector<8x64xf32> to vector<8x1xf32>
    %73 = vector.extract_strided_slice %7 {offsets = [2, 0], sizes = [1, 384], strides = [1, 1]} : vector<4x384xf32> to vector<1x384xf32>
    %74 = vector.broadcast %72 : vector<8x1xf32> to vector<8x384xf32>
    %75 = vector.broadcast %73 : vector<1x384xf32> to vector<8x384xf32>
    %76 = arith.mulf %74, %75 : vector<8x384xf32>
    %77 = arith.addf %71, %76 : vector<8x384xf32>
    %78 = vector.extract_strided_slice %0 {offsets = [0, 11], sizes = [8, 1], strides = [1, 1]} : vector<8x64xf32> to vector<8x1xf32>
    %79 = vector.extract_strided_slice %7 {offsets = [3, 0], sizes = [1, 384], strides = [1, 1]} : vector<4x384xf32> to vector<1x384xf32>
    %80 = vector.broadcast %78 : vector<8x1xf32> to vector<8x384xf32>
    %81 = vector.broadcast %79 : vector<1x384xf32> to vector<8x384xf32>
    %82 = arith.mulf %80, %81 : vector<8x384xf32>
    %83 = arith.addf %77, %82 : vector<8x384xf32>
    %84 = vector.extract_strided_slice %0 {offsets = [0, 12], sizes = [8, 1], strides = [1, 1]} : vector<8x64xf32> to vector<8x1xf32>
    %85 = vector.extract_strided_slice %8 {offsets = [0, 0], sizes = [1, 384], strides = [1, 1]} : vector<4x384xf32> to vector<1x384xf32>
    %86 = vector.broadcast %84 : vector<8x1xf32> to vector<8x384xf32>
    %87 = vector.broadcast %85 : vector<1x384xf32> to vector<8x384xf32>
    %88 = arith.mulf %86, %87 : vector<8x384xf32>
    %89 = arith.addf %83, %88 : vector<8x384xf32>
    %90 = vector.extract_strided_slice %0 {offsets = [0, 13], sizes = [8, 1], strides = [1, 1]} : vector<8x64xf32> to vector<8x1xf32>
    %91 = vector.extract_strided_slice %8 {offsets = [1, 0], sizes = [1, 384], strides = [1, 1]} : vector<4x384xf32> to vector<1x384xf32>
    %92 = vector.broadcast %90 : vector<8x1xf32> to vector<8x384xf32>
    %93 = vector.broadcast %91 : vector<1x384xf32> to vector<8x384xf32>
    %94 = arith.mulf %92, %93 : vector<8x384xf32>
    %95 = arith.addf %89, %94 : vector<8x384xf32>
    %96 = vector.extract_strided_slice %0 {offsets = [0, 14], sizes = [8, 1], strides = [1, 1]} : vector<8x64xf32> to vector<8x1xf32>
    %97 = vector.extract_strided_slice %8 {offsets = [2, 0], sizes = [1, 384], strides = [1, 1]} : vector<4x384xf32> to vector<1x384xf32>
    %98 = vector.broadcast %96 : vector<8x1xf32> to vector<8x384xf32>
    %99 = vector.broadcast %97 : vector<1x384xf32> to vector<8x384xf32>
    %100 = arith.mulf %98, %99 : vector<8x384xf32>
    %101 = arith.addf %95, %100 : vector<8x384xf32>
    %102 = vector.extract_strided_slice %0 {offsets = [0, 15], sizes = [8, 1], strides = [1, 1]} : vector<8x64xf32> to vector<8x1xf32>
    %103 = vector.extract_strided_slice %8 {offsets = [3, 0], sizes = [1, 384], strides = [1, 1]} : vector<4x384xf32> to vector<1x384xf32>
    %104 = vector.broadcast %102 : vector<8x1xf32> to vector<8x384xf32>
    %105 = vector.broadcast %103 : vector<1x384xf32> to vector<8x384xf32>
    %106 = arith.mulf %104, %105 : vector<8x384xf32>
    %107 = arith.addf %101, %106 : vector<8x384xf32>
    %108 = vector.broadcast %1 : vector<8x1xf32> to vector<8x384xf32>
    %109 = arith.addf %107, %108 : vector<8x384xf32>
    %cst = arith.constant 0.000000e+00 : f32
    %110 = vector.broadcast %cst : f32 to vector<8x384xf32>
    %111 = arith.maximumf %109, %110 : vector<8x384xf32>
    %c0_6 = arith.constant 0 : index
    %c0_7 = arith.constant 0 : index
    %c0_8 = arith.constant 0 : index
    %112 = vector.load %arg4[%c0_6, %c0_7, %c0_8] : memref<1x32x384xf32, #tpu.memory_space<vmem>>, vector<1x8x384xf32>
    %113 = vector.shape_cast %112 : vector<1x8x384xf32> to vector<8x384xf32>
    %114 = vector.shape_cast %111 : vector<8x384xf32> to vector<1x8x384xf32>
    tpu.vector_store %arg4[%c0_6, %c0_7, %c0_8], %114 {strides = array<i32>} : memref<1x32x384xf32, #tpu.memory_space<vmem>>, vector<1x8x384xf32>,
    %115 = vector.extract_strided_slice %0 {offsets = [0, 16], sizes = [8, 1], strides = [1, 1]} : vector<8x64xf32> to vector<8x1xf32>
    %116 = vector.extract_strided_slice %5 {offsets = [0, 0], sizes = [1, 384], strides = [1, 1]} : vector<4x384xf32> to vector<1x384xf32>
    %117 = vector.broadcast %115 : vector<8x1xf32> to vector<8x384xf32>
    %118 = vector.broadcast %116 : vector<1x384xf32> to vector<8x384xf32>
    %119 = arith.mulf %117, %118 : vector<8x384xf32>
    %120 = vector.extract_strided_slice %0 {offsets = [0, 17], sizes = [8, 1], strides = [1, 1]} : vector<8x64xf32> to vector<8x1xf32>
    %121 = vector.extract_strided_slice %5 {offsets = [1, 0], sizes = [1, 384], strides = [1, 1]} : vector<4x384xf32> to vector<1x384xf32>
    %122 = vector.broadcast %120 : vector<8x1xf32> to vector<8x384xf32>
    %123 = vector.broadcast %121 : vector<1x384xf32> to vector<8x384xf32>
    %124 = arith.mulf %122, %123 : vector<8x384xf32>
    %125 = arith.addf %119, %124 : vector<8x384xf32>
    %126 = vector.extract_strided_slice %0 {offsets = [0, 18], sizes = [8, 1], strides = [1, 1]} : vector<8x64xf32> to vector<8x1xf32>
    %127 = vector.extract_strided_slice %5 {offsets = [2, 0], sizes = [1, 384], strides = [1, 1]} : vector<4x384xf32> to vector<1x384xf32>
    %128 = vector.broadcast %126 : vector<8x1xf32> to vector<8x384xf32>
    %129 = vector.broadcast %127 : vector<1x384xf32> to vector<8x384xf32>
    %130 = arith.mulf %128, %129 : vector<8x384xf32>
    %131 = arith.addf %125, %130 : vector<8x384xf32>
    %132 = vector.extract_strided_slice %0 {offsets = [0, 19], sizes = [8, 1], strides = [1, 1]} : vector<8x64xf32> to vector<8x1xf32>
    %133 = vector.extract_strided_slice %5 {offsets = [3, 0], sizes = [1, 384], strides = [1, 1]} : vector<4x384xf32> to vector<1x384xf32>
    %134 = vector.broadcast %132 : vector<8x1xf32> to vector<8x384xf32>
    %135 = vector.broadcast %133 : vector<1x384xf32> to vector<8x384xf32>
    %136 = arith.mulf %134, %135 : vector<8x384xf32>
    %137 = arith.addf %131, %136 : vector<8x384xf32>
    %138 = vector.extract_strided_slice %0 {offsets = [0, 20], sizes = [8, 1], strides = [1, 1]} : vector<8x64xf32> to vector<8x1xf32>
    %139 = vector.extract_strided_slice %6 {offsets = [0, 0], sizes = [1, 384], strides = [1, 1]} : vector<4x384xf32> to vector<1x384xf32>
    %140 = vector.broadcast %138 : vector<8x1xf32> to vector<8x384xf32>
    %141 = vector.broadcast %139 : vector<1x384xf32> to vector<8x384xf32>
    %142 = arith.mulf %140, %141 : vector<8x384xf32>
    %143 = arith.addf %137, %142 : vector<8x384xf32>
    %144 = vector.extract_strided_slice %0 {offsets = [0, 21], sizes = [8, 1], strides = [1, 1]} : vector<8x64xf32> to vector<8x1xf32>
    %145 = vector.extract_strided_slice %6 {offsets = [1, 0], sizes = [1, 384], strides = [1, 1]} : vector<4x384xf32> to vector<1x384xf32>
    %146 = vector.broadcast %144 : vector<8x1xf32> to vector<8x384xf32>
    %147 = vector.broadcast %145 : vector<1x384xf32> to vector<8x384xf32>
    %148 = arith.mulf %146, %147 : vector<8x384xf32>
    %149 = arith.addf %143, %148 : vector<8x384xf32>
    %150 = vector.extract_strided_slice %0 {offsets = [0, 22], sizes = [8, 1], strides = [1, 1]} : vector<8x64xf32> to vector<8x1xf32>
    %151 = vector.extract_strided_slice %6 {offsets = [2, 0], sizes = [1, 384], strides = [1, 1]} : vector<4x384xf32> to vector<1x384xf32>
    %152 = vector.broadcast %150 : vector<8x1xf32> to vector<8x384xf32>
    %153 = vector.broadcast %151 : vector<1x384xf32> to vector<8x384xf32>
    %154 = arith.mulf %152, %153 : vector<8x384xf32>
    %155 = arith.addf %149, %154 : vector<8x384xf32>
    %156 = vector.extract_strided_slice %0 {offsets = [0, 23], sizes = [8, 1], strides = [1, 1]} : vector<8x64xf32> to vector<8x1xf32>
    %157 = vector.extract_strided_slice %6 {offsets = [3, 0], sizes = [1, 384], strides = [1, 1]} : vector<4x384xf32> to vector<1x384xf32>
    %158 = vector.broadcast %156 : vector<8x1xf32> to vector<8x384xf32>
    %159 = vector.broadcast %157 : vector<1x384xf32> to vector<8x384xf32>
    %160 = arith.mulf %158, %159 : vector<8x384xf32>
    %161 = arith.addf %155, %160 : vector<8x384xf32>
    %162 = vector.extract_strided_slice %0 {offsets = [0, 24], sizes = [8, 1], strides = [1, 1]} : vector<8x64xf32> to vector<8x1xf32>
    %163 = vector.extract_strided_slice %8 {offsets = [0, 0], sizes = [1, 384], strides = [1, 1]} : vector<4x384xf32> to vector<1x384xf32>
    %164 = vector.broadcast %162 : vector<8x1xf32> to vector<8x384xf32>
    %165 = vector.broadcast %163 : vector<1x384xf32> to vector<8x384xf32>
    %166 = arith.mulf %164, %165 : vector<8x384xf32>
    %167 = arith.addf %161, %166 : vector<8x384xf32>
    %168 = vector.extract_strided_slice %0 {offsets = [0, 25], sizes = [8, 1], strides = [1, 1]} : vector<8x64xf32> to vector<8x1xf32>
    %169 = vector.extract_strided_slice %8 {offsets = [1, 0], sizes = [1, 384], strides = [1, 1]} : vector<4x384xf32> to vector<1x384xf32>
    %170 = vector.broadcast %168 : vector<8x1xf32> to vector<8x384xf32>
    %171 = vector.broadcast %169 : vector<1x384xf32> to vector<8x384xf32>
    %172 = arith.mulf %170, %171 : vector<8x384xf32>
    %173 = arith.addf %167, %172 : vector<8x384xf32>
    %174 = vector.extract_strided_slice %0 {offsets = [0, 26], sizes = [8, 1], strides = [1, 1]} : vector<8x64xf32> to vector<8x1xf32>
    %175 = vector.extract_strided_slice %8 {offsets = [2, 0], sizes = [1, 384], strides = [1, 1]} : vector<4x384xf32> to vector<1x384xf32>
    %176 = vector.broadcast %174 : vector<8x1xf32> to vector<8x384xf32>
    %177 = vector.broadcast %175 : vector<1x384xf32> to vector<8x384xf32>
    %178 = arith.mulf %176, %177 : vector<8x384xf32>
    %179 = arith.addf %173, %178 : vector<8x384xf32>
    %180 = vector.extract_strided_slice %0 {offsets = [0, 27], sizes = [8, 1], strides = [1, 1]} : vector<8x64xf32> to vector<8x1xf32>
    %181 = vector.extract_strided_slice %8 {offsets = [3, 0], sizes = [1, 384], strides = [1, 1]} : vector<4x384xf32> to vector<1x384xf32>
    %182 = vector.broadcast %180 : vector<8x1xf32> to vector<8x384xf32>
    %183 = vector.broadcast %181 : vector<1x384xf32> to vector<8x384xf32>
    %184 = arith.mulf %182, %183 : vector<8x384xf32>
    %185 = arith.addf %179, %184 : vector<8x384xf32>
    %186 = vector.extract_strided_slice %0 {offsets = [0, 28], sizes = [8, 1], strides = [1, 1]} : vector<8x64xf32> to vector<8x1xf32>
    %187 = vector.extract_strided_slice %9 {offsets = [0, 0], sizes = [1, 384], strides = [1, 1]} : vector<4x384xf32> to vector<1x384xf32>
    %188 = vector.broadcast %186 : vector<8x1xf32> to vector<8x384xf32>
    %189 = vector.broadcast %187 : vector<1x384xf32> to vector<8x384xf32>
    %190 = arith.mulf %188, %189 : vector<8x384xf32>
    %191 = arith.addf %185, %190 : vector<8x384xf32>
    %192 = vector.extract_strided_slice %0 {offsets = [0, 29], sizes = [8, 1], strides = [1, 1]} : vector<8x64xf32> to vector<8x1xf32>
    %193 = vector.extract_strided_slice %9 {offsets = [1, 0], sizes = [1, 384], strides = [1, 1]} : vector<4x384xf32> to vector<1x384xf32>
    %194 = vector.broadcast %192 : vector<8x1xf32> to vector<8x384xf32>
    %195 = vector.broadcast %193 : vector<1x384xf32> to vector<8x384xf32>
    %196 = arith.mulf %194, %195 : vector<8x384xf32>
    %197 = arith.addf %191, %196 : vector<8x384xf32>
    %198 = vector.extract_strided_slice %0 {offsets = [0, 30], sizes = [8, 1], strides = [1, 1]} : vector<8x64xf32> to vector<8x1xf32>
    %199 = vector.extract_strided_slice %9 {offsets = [2, 0], sizes = [1, 384], strides = [1, 1]} : vector<4x384xf32> to vector<1x384xf32>
    %200 = vector.broadcast %198 : vector<8x1xf32> to vector<8x384xf32>
    %201 = vector.broadcast %199 : vector<1x384xf32> to vector<8x384xf32>
    %202 = arith.mulf %200, %201 : vector<8x384xf32>
    %203 = arith.addf %197, %202 : vector<8x384xf32>
    %204 = vector.extract_strided_slice %0 {offsets = [0, 31], sizes = [8, 1], strides = [1, 1]} : vector<8x64xf32> to vector<8x1xf32>
    %205 = vector.extract_strided_slice %9 {offsets = [3, 0], sizes = [1, 384], strides = [1, 1]} : vector<4x384xf32> to vector<1x384xf32>
    %206 = vector.broadcast %204 : vector<8x1xf32> to vector<8x384xf32>
    %207 = vector.broadcast %205 : vector<1x384xf32> to vector<8x384xf32>
    %208 = arith.mulf %206, %207 : vector<8x384xf32>
    %209 = arith.addf %203, %208 : vector<8x384xf32>
    %210 = vector.broadcast %1 : vector<8x1xf32> to vector<8x384xf32>
    %211 = arith.addf %209, %210 : vector<8x384xf32>
    %cst_9 = arith.constant 0.000000e+00 : f32
    %212 = vector.broadcast %cst_9 : f32 to vector<8x384xf32>
    %213 = arith.maximumf %211, %212 : vector<8x384xf32>
    %c0_10 = arith.constant 0 : index
    %c8 = arith.constant 8 : index
    %c0_11 = arith.constant 0 : index
    %214 = vector.load %arg4[%c0_10, %c8, %c0_11] : memref<1x32x384xf32, #tpu.memory_space<vmem>>, vector<1x8x384xf32>
    %215 = vector.shape_cast %214 : vector<1x8x384xf32> to vector<8x384xf32>
    %216 = vector.shape_cast %213 : vector<8x384xf32> to vector<1x8x384xf32>
    tpu.vector_store %arg4[%c0_10, %c8, %c0_11], %216 {strides = array<i32>} : memref<1x32x384xf32, #tpu.memory_space<vmem>>, vector<1x8x384xf32>,
    %217 = vector.extract_strided_slice %0 {offsets = [0, 32], sizes = [8, 1], strides = [1, 1]} : vector<8x64xf32> to vector<8x1xf32>
    %218 = vector.extract_strided_slice %7 {offsets = [0, 0], sizes = [1, 384], strides = [1, 1]} : vector<4x384xf32> to vector<1x384xf32>
    %219 = vector.broadcast %217 : vector<8x1xf32> to vector<8x384xf32>
    %220 = vector.broadcast %218 : vector<1x384xf32> to vector<8x384xf32>
    %221 = arith.mulf %219, %220 : vector<8x384xf32>
    %222 = vector.extract_strided_slice %0 {offsets = [0, 33], sizes = [8, 1], strides = [1, 1]} : vector<8x64xf32> to vector<8x1xf32>
    %223 = vector.extract_strided_slice %7 {offsets = [1, 0], sizes = [1, 384], strides = [1, 1]} : vector<4x384xf32> to vector<1x384xf32>
    %224 = vector.broadcast %222 : vector<8x1xf32> to vector<8x384xf32>
    %225 = vector.broadcast %223 : vector<1x384xf32> to vector<8x384xf32>
    %226 = arith.mulf %224, %225 : vector<8x384xf32>
    %227 = arith.addf %221, %226 : vector<8x384xf32>
    %228 = vector.extract_strided_slice %0 {offsets = [0, 34], sizes = [8, 1], strides = [1, 1]} : vector<8x64xf32> to vector<8x1xf32>
    %229 = vector.extract_strided_slice %7 {offsets = [2, 0], sizes = [1, 384], strides = [1, 1]} : vector<4x384xf32> to vector<1x384xf32>
    %230 = vector.broadcast %228 : vector<8x1xf32> to vector<8x384xf32>
    %231 = vector.broadcast %229 : vector<1x384xf32> to vector<8x384xf32>
    %232 = arith.mulf %230, %231 : vector<8x384xf32>
    %233 = arith.addf %227, %232 : vector<8x384xf32>
    %234 = vector.extract_strided_slice %0 {offsets = [0, 35], sizes = [8, 1], strides = [1, 1]} : vector<8x64xf32> to vector<8x1xf32>
    %235 = vector.extract_strided_slice %7 {offsets = [3, 0], sizes = [1, 384], strides = [1, 1]} : vector<4x384xf32> to vector<1x384xf32>
    %236 = vector.broadcast %234 : vector<8x1xf32> to vector<8x384xf32>
    %237 = vector.broadcast %235 : vector<1x384xf32> to vector<8x384xf32>
    %238 = arith.mulf %236, %237 : vector<8x384xf32>
    %239 = arith.addf %233, %238 : vector<8x384xf32>
    %240 = vector.extract_strided_slice %0 {offsets = [0, 36], sizes = [8, 1], strides = [1, 1]} : vector<8x64xf32> to vector<8x1xf32>
    %241 = vector.extract_strided_slice %8 {offsets = [0, 0], sizes = [1, 384], strides = [1, 1]} : vector<4x384xf32> to vector<1x384xf32>
    %242 = vector.broadcast %240 : vector<8x1xf32> to vector<8x384xf32>
    %243 = vector.broadcast %241 : vector<1x384xf32> to vector<8x384xf32>
    %244 = arith.mulf %242, %243 : vector<8x384xf32>
    %245 = arith.addf %239, %244 : vector<8x384xf32>
    %246 = vector.extract_strided_slice %0 {offsets = [0, 37], sizes = [8, 1], strides = [1, 1]} : vector<8x64xf32> to vector<8x1xf32>
    %247 = vector.extract_strided_slice %8 {offsets = [1, 0], sizes = [1, 384], strides = [1, 1]} : vector<4x384xf32> to vector<1x384xf32>
    %248 = vector.broadcast %246 : vector<8x1xf32> to vector<8x384xf32>
    %249 = vector.broadcast %247 : vector<1x384xf32> to vector<8x384xf32>
    %250 = arith.mulf %248, %249 : vector<8x384xf32>
    %251 = arith.addf %245, %250 : vector<8x384xf32>
    %252 = vector.extract_strided_slice %0 {offsets = [0, 38], sizes = [8, 1], strides = [1, 1]} : vector<8x64xf32> to vector<8x1xf32>
    %253 = vector.extract_strided_slice %8 {offsets = [2, 0], sizes = [1, 384], strides = [1, 1]} : vector<4x384xf32> to vector<1x384xf32>
    %254 = vector.broadcast %252 : vector<8x1xf32> to vector<8x384xf32>
    %255 = vector.broadcast %253 : vector<1x384xf32> to vector<8x384xf32>
    %256 = arith.mulf %254, %255 : vector<8x384xf32>
    %257 = arith.addf %251, %256 : vector<8x384xf32>
    %258 = vector.extract_strided_slice %0 {offsets = [0, 39], sizes = [8, 1], strides = [1, 1]} : vector<8x64xf32> to vector<8x1xf32>
    %259 = vector.extract_strided_slice %8 {offsets = [3, 0], sizes = [1, 384], strides = [1, 1]} : vector<4x384xf32> to vector<1x384xf32>
    %260 = vector.broadcast %258 : vector<8x1xf32> to vector<8x384xf32>
    %261 = vector.broadcast %259 : vector<1x384xf32> to vector<8x384xf32>
    %262 = arith.mulf %260, %261 : vector<8x384xf32>
    %263 = arith.addf %257, %262 : vector<8x384xf32>
    %264 = vector.extract_strided_slice %0 {offsets = [0, 40], sizes = [8, 1], strides = [1, 1]} : vector<8x64xf32> to vector<8x1xf32>
    %265 = vector.extract_strided_slice %10 {offsets = [0, 0], sizes = [1, 384], strides = [1, 1]} : vector<4x384xf32> to vector<1x384xf32>
    %266 = vector.broadcast %264 : vector<8x1xf32> to vector<8x384xf32>
    %267 = vector.broadcast %265 : vector<1x384xf32> to vector<8x384xf32>
    %268 = arith.mulf %266, %267 : vector<8x384xf32>
    %269 = arith.addf %263, %268 : vector<8x384xf32>
    %270 = vector.extract_strided_slice %0 {offsets = [0, 41], sizes = [8, 1], strides = [1, 1]} : vector<8x64xf32> to vector<8x1xf32>
    %271 = vector.extract_strided_slice %10 {offsets = [1, 0], sizes = [1, 384], strides = [1, 1]} : vector<4x384xf32> to vector<1x384xf32>
    %272 = vector.broadcast %270 : vector<8x1xf32> to vector<8x384xf32>
    %273 = vector.broadcast %271 : vector<1x384xf32> to vector<8x384xf32>
    %274 = arith.mulf %272, %273 : vector<8x384xf32>
    %275 = arith.addf %269, %274 : vector<8x384xf32>
    %276 = vector.extract_strided_slice %0 {offsets = [0, 42], sizes = [8, 1], strides = [1, 1]} : vector<8x64xf32> to vector<8x1xf32>
    %277 = vector.extract_strided_slice %10 {offsets = [2, 0], sizes = [1, 384], strides = [1, 1]} : vector<4x384xf32> to vector<1x384xf32>
    %278 = vector.broadcast %276 : vector<8x1xf32> to vector<8x384xf32>
    %279 = vector.broadcast %277 : vector<1x384xf32> to vector<8x384xf32>
    %280 = arith.mulf %278, %279 : vector<8x384xf32>
    %281 = arith.addf %275, %280 : vector<8x384xf32>
    %282 = vector.extract_strided_slice %0 {offsets = [0, 43], sizes = [8, 1], strides = [1, 1]} : vector<8x64xf32> to vector<8x1xf32>
    %283 = vector.extract_strided_slice %10 {offsets = [3, 0], sizes = [1, 384], strides = [1, 1]} : vector<4x384xf32> to vector<1x384xf32>
    %284 = vector.broadcast %282 : vector<8x1xf32> to vector<8x384xf32>
    %285 = vector.broadcast %283 : vector<1x384xf32> to vector<8x384xf32>
    %286 = arith.mulf %284, %285 : vector<8x384xf32>
    %287 = arith.addf %281, %286 : vector<8x384xf32>
    %288 = vector.extract_strided_slice %0 {offsets = [0, 44], sizes = [8, 1], strides = [1, 1]} : vector<8x64xf32> to vector<8x1xf32>
    %289 = vector.extract_strided_slice %11 {offsets = [0, 0], sizes = [1, 384], strides = [1, 1]} : vector<4x384xf32> to vector<1x384xf32>
    %290 = vector.broadcast %288 : vector<8x1xf32> to vector<8x384xf32>
    %291 = vector.broadcast %289 : vector<1x384xf32> to vector<8x384xf32>
    %292 = arith.mulf %290, %291 : vector<8x384xf32>
    %293 = arith.addf %287, %292 : vector<8x384xf32>
    %294 = vector.extract_strided_slice %0 {offsets = [0, 45], sizes = [8, 1], strides = [1, 1]} : vector<8x64xf32> to vector<8x1xf32>
    %295 = vector.extract_strided_slice %11 {offsets = [1, 0], sizes = [1, 384], strides = [1, 1]} : vector<4x384xf32> to vector<1x384xf32>
    %296 = vector.broadcast %294 : vector<8x1xf32> to vector<8x384xf32>
    %297 = vector.broadcast %295 : vector<1x384xf32> to vector<8x384xf32>
    %298 = arith.mulf %296, %297 : vector<8x384xf32>
    %299 = arith.addf %293, %298 : vector<8x384xf32>
    %300 = vector.extract_strided_slice %0 {offsets = [0, 46], sizes = [8, 1], strides = [1, 1]} : vector<8x64xf32> to vector<8x1xf32>
    %301 = vector.extract_strided_slice %11 {offsets = [2, 0], sizes = [1, 384], strides = [1, 1]} : vector<4x384xf32> to vector<1x384xf32>
    %302 = vector.broadcast %300 : vector<8x1xf32> to vector<8x384xf32>
    %303 = vector.broadcast %301 : vector<1x384xf32> to vector<8x384xf32>
    %304 = arith.mulf %302, %303 : vector<8x384xf32>
    %305 = arith.addf %299, %304 : vector<8x384xf32>
    %306 = vector.extract_strided_slice %0 {offsets = [0, 47], sizes = [8, 1], strides = [1, 1]} : vector<8x64xf32> to vector<8x1xf32>
    %307 = vector.extract_strided_slice %11 {offsets = [3, 0], sizes = [1, 384], strides = [1, 1]} : vector<4x384xf32> to vector<1x384xf32>
    %308 = vector.broadcast %306 : vector<8x1xf32> to vector<8x384xf32>
    %309 = vector.broadcast %307 : vector<1x384xf32> to vector<8x384xf32>
    %310 = arith.mulf %308, %309 : vector<8x384xf32>
    %311 = arith.addf %305, %310 : vector<8x384xf32>
    %312 = vector.broadcast %1 : vector<8x1xf32> to vector<8x384xf32>
    %313 = arith.addf %311, %312 : vector<8x384xf32>
    %cst_12 = arith.constant 0.000000e+00 : f32
    %314 = vector.broadcast %cst_12 : f32 to vector<8x384xf32>
    %315 = arith.maximumf %313, %314 : vector<8x384xf32>
    %c0_13 = arith.constant 0 : index
    %c16 = arith.constant 16 : index
    %c0_14 = arith.constant 0 : index
    %316 = vector.load %arg4[%c0_13, %c16, %c0_14] : memref<1x32x384xf32, #tpu.memory_space<vmem>>, vector<1x8x384xf32>
    %317 = vector.shape_cast %316 : vector<1x8x384xf32> to vector<8x384xf32>
    %318 = vector.shape_cast %315 : vector<8x384xf32> to vector<1x8x384xf32>
    tpu.vector_store %arg4[%c0_13, %c16, %c0_14], %318 {strides = array<i32>} : memref<1x32x384xf32, #tpu.memory_space<vmem>>, vector<1x8x384xf32>,
    %319 = vector.extract_strided_slice %0 {offsets = [0, 48], sizes = [8, 1], strides = [1, 1]} : vector<8x64xf32> to vector<8x1xf32>
    %320 = vector.extract_strided_slice %8 {offsets = [0, 0], sizes = [1, 384], strides = [1, 1]} : vector<4x384xf32> to vector<1x384xf32>
    %321 = vector.broadcast %319 : vector<8x1xf32> to vector<8x384xf32>
    %322 = vector.broadcast %320 : vector<1x384xf32> to vector<8x384xf32>
    %323 = arith.mulf %321, %322 : vector<8x384xf32>
    %324 = vector.extract_strided_slice %0 {offsets = [0, 49], sizes = [8, 1], strides = [1, 1]} : vector<8x64xf32> to vector<8x1xf32>
    %325 = vector.extract_strided_slice %8 {offsets = [1, 0], sizes = [1, 384], strides = [1, 1]} : vector<4x384xf32> to vector<1x384xf32>
    %326 = vector.broadcast %324 : vector<8x1xf32> to vector<8x384xf32>
    %327 = vector.broadcast %325 : vector<1x384xf32> to vector<8x384xf32>
    %328 = arith.mulf %326, %327 : vector<8x384xf32>
    %329 = arith.addf %323, %328 : vector<8x384xf32>
    %330 = vector.extract_strided_slice %0 {offsets = [0, 50], sizes = [8, 1], strides = [1, 1]} : vector<8x64xf32> to vector<8x1xf32>
    %331 = vector.extract_strided_slice %8 {offsets = [2, 0], sizes = [1, 384], strides = [1, 1]} : vector<4x384xf32> to vector<1x384xf32>
    %332 = vector.broadcast %330 : vector<8x1xf32> to vector<8x384xf32>
    %333 = vector.broadcast %331 : vector<1x384xf32> to vector<8x384xf32>
    %334 = arith.mulf %332, %333 : vector<8x384xf32>
    %335 = arith.addf %329, %334 : vector<8x384xf32>
    %336 = vector.extract_strided_slice %0 {offsets = [0, 51], sizes = [8, 1], strides = [1, 1]} : vector<8x64xf32> to vector<8x1xf32>
    %337 = vector.extract_strided_slice %8 {offsets = [3, 0], sizes = [1, 384], strides = [1, 1]} : vector<4x384xf32> to vector<1x384xf32>
    %338 = vector.broadcast %336 : vector<8x1xf32> to vector<8x384xf32>
    %339 = vector.broadcast %337 : vector<1x384xf32> to vector<8x384xf32>
    %340 = arith.mulf %338, %339 : vector<8x384xf32>
    %341 = arith.addf %335, %340 : vector<8x384xf32>
    %342 = vector.extract_strided_slice %0 {offsets = [0, 52], sizes = [8, 1], strides = [1, 1]} : vector<8x64xf32> to vector<8x1xf32>
    %343 = vector.extract_strided_slice %9 {offsets = [0, 0], sizes = [1, 384], strides = [1, 1]} : vector<4x384xf32> to vector<1x384xf32>
    %344 = vector.broadcast %342 : vector<8x1xf32> to vector<8x384xf32>
    %345 = vector.broadcast %343 : vector<1x384xf32> to vector<8x384xf32>
    %346 = arith.mulf %344, %345 : vector<8x384xf32>
    %347 = arith.addf %341, %346 : vector<8x384xf32>
    %348 = vector.extract_strided_slice %0 {offsets = [0, 53], sizes = [8, 1], strides = [1, 1]} : vector<8x64xf32> to vector<8x1xf32>
    %349 = vector.extract_strided_slice %9 {offsets = [1, 0], sizes = [1, 384], strides = [1, 1]} : vector<4x384xf32> to vector<1x384xf32>
    %350 = vector.broadcast %348 : vector<8x1xf32> to vector<8x384xf32>
    %351 = vector.broadcast %349 : vector<1x384xf32> to vector<8x384xf32>
    %352 = arith.mulf %350, %351 : vector<8x384xf32>
    %353 = arith.addf %347, %352 : vector<8x384xf32>
    %354 = vector.extract_strided_slice %0 {offsets = [0, 54], sizes = [8, 1], strides = [1, 1]} : vector<8x64xf32> to vector<8x1xf32>
    %355 = vector.extract_strided_slice %9 {offsets = [2, 0], sizes = [1, 384], strides = [1, 1]} : vector<4x384xf32> to vector<1x384xf32>
    %356 = vector.broadcast %354 : vector<8x1xf32> to vector<8x384xf32>
    %357 = vector.broadcast %355 : vector<1x384xf32> to vector<8x384xf32>
    %358 = arith.mulf %356, %357 : vector<8x384xf32>
    %359 = arith.addf %353, %358 : vector<8x384xf32>
    %360 = vector.extract_strided_slice %0 {offsets = [0, 55], sizes = [8, 1], strides = [1, 1]} : vector<8x64xf32> to vector<8x1xf32>
    %361 = vector.extract_strided_slice %9 {offsets = [3, 0], sizes = [1, 384], strides = [1, 1]} : vector<4x384xf32> to vector<1x384xf32>
    %362 = vector.broadcast %360 : vector<8x1xf32> to vector<8x384xf32>
    %363 = vector.broadcast %361 : vector<1x384xf32> to vector<8x384xf32>
    %364 = arith.mulf %362, %363 : vector<8x384xf32>
    %365 = arith.addf %359, %364 : vector<8x384xf32>
    %366 = vector.extract_strided_slice %0 {offsets = [0, 56], sizes = [8, 1], strides = [1, 1]} : vector<8x64xf32> to vector<8x1xf32>
    %367 = vector.extract_strided_slice %11 {offsets = [0, 0], sizes = [1, 384], strides = [1, 1]} : vector<4x384xf32> to vector<1x384xf32>
    %368 = vector.broadcast %366 : vector<8x1xf32> to vector<8x384xf32>
    %369 = vector.broadcast %367 : vector<1x384xf32> to vector<8x384xf32>
    %370 = arith.mulf %368, %369 : vector<8x384xf32>
    %371 = arith.addf %365, %370 : vector<8x384xf32>
    %372 = vector.extract_strided_slice %0 {offsets = [0, 57], sizes = [8, 1], strides = [1, 1]} : vector<8x64xf32> to vector<8x1xf32>
    %373 = vector.extract_strided_slice %11 {offsets = [1, 0], sizes = [1, 384], strides = [1, 1]} : vector<4x384xf32> to vector<1x384xf32>
    %374 = vector.broadcast %372 : vector<8x1xf32> to vector<8x384xf32>
    %375 = vector.broadcast %373 : vector<1x384xf32> to vector<8x384xf32>
    %376 = arith.mulf %374, %375 : vector<8x384xf32>
    %377 = arith.addf %371, %376 : vector<8x384xf32>
    %378 = vector.extract_strided_slice %0 {offsets = [0, 58], sizes = [8, 1], strides = [1, 1]} : vector<8x64xf32> to vector<8x1xf32>
    %379 = vector.extract_strided_slice %11 {offsets = [2, 0], sizes = [1, 384], strides = [1, 1]} : vector<4x384xf32> to vector<1x384xf32>
    %380 = vector.broadcast %378 : vector<8x1xf32> to vector<8x384xf32>
    %381 = vector.broadcast %379 : vector<1x384xf32> to vector<8x384xf32>
    %382 = arith.mulf %380, %381 : vector<8x384xf32>
    %383 = arith.addf %377, %382 : vector<8x384xf32>
    %384 = vector.extract_strided_slice %0 {offsets = [0, 59], sizes = [8, 1], strides = [1, 1]} : vector<8x64xf32> to vector<8x1xf32>
    %385 = vector.extract_strided_slice %11 {offsets = [3, 0], sizes = [1, 384], strides = [1, 1]} : vector<4x384xf32> to vector<1x384xf32>
    %386 = vector.broadcast %384 : vector<8x1xf32> to vector<8x384xf32>
    %387 = vector.broadcast %385 : vector<1x384xf32> to vector<8x384xf32>
    %388 = arith.mulf %386, %387 : vector<8x384xf32>
    %389 = arith.addf %383, %388 : vector<8x384xf32>
    %390 = vector.extract_strided_slice %0 {offsets = [0, 60], sizes = [8, 1], strides = [1, 1]} : vector<8x64xf32> to vector<8x1xf32>
    %391 = vector.extract_strided_slice %12 {offsets = [0, 0], sizes = [1, 384], strides = [1, 1]} : vector<4x384xf32> to vector<1x384xf32>
    %392 = vector.broadcast %390 : vector<8x1xf32> to vector<8x384xf32>
    %393 = vector.broadcast %391 : vector<1x384xf32> to vector<8x384xf32>
    %394 = arith.mulf %392, %393 : vector<8x384xf32>
    %395 = arith.addf %389, %394 : vector<8x384xf32>
    %396 = vector.extract_strided_slice %0 {offsets = [0, 61], sizes = [8, 1], strides = [1, 1]} : vector<8x64xf32> to vector<8x1xf32>
    %397 = vector.extract_strided_slice %12 {offsets = [1, 0], sizes = [1, 384], strides = [1, 1]} : vector<4x384xf32> to vector<1x384xf32>
    %398 = vector.broadcast %396 : vector<8x1xf32> to vector<8x384xf32>
    %399 = vector.broadcast %397 : vector<1x384xf32> to vector<8x384xf32>
    %400 = arith.mulf %398, %399 : vector<8x384xf32>
    %401 = arith.addf %395, %400 : vector<8x384xf32>
    %402 = vector.extract_strided_slice %0 {offsets = [0, 62], sizes = [8, 1], strides = [1, 1]} : vector<8x64xf32> to vector<8x1xf32>
    %403 = vector.extract_strided_slice %12 {offsets = [2, 0], sizes = [1, 384], strides = [1, 1]} : vector<4x384xf32> to vector<1x384xf32>
    %404 = vector.broadcast %402 : vector<8x1xf32> to vector<8x384xf32>
    %405 = vector.broadcast %403 : vector<1x384xf32> to vector<8x384xf32>
    %406 = arith.mulf %404, %405 : vector<8x384xf32>
    %407 = arith.addf %401, %406 : vector<8x384xf32>
    %408 = vector.extract_strided_slice %0 {offsets = [0, 63], sizes = [8, 1], strides = [1, 1]} : vector<8x64xf32> to vector<8x1xf32>
    %409 = vector.extract_strided_slice %12 {offsets = [3, 0], sizes = [1, 384], strides = [1, 1]} : vector<4x384xf32> to vector<1x384xf32>
    %410 = vector.broadcast %408 : vector<8x1xf32> to vector<8x384xf32>
    %411 = vector.broadcast %409 : vector<1x384xf32> to vector<8x384xf32>
    %412 = arith.mulf %410, %411 : vector<8x384xf32>
    %413 = arith.addf %407, %412 : vector<8x384xf32>
    %414 = vector.broadcast %1 : vector<8x1xf32> to vector<8x384xf32>
    %415 = arith.addf %413, %414 : vector<8x384xf32>
    %cst_15 = arith.constant 0.000000e+00 : f32
    %416 = vector.broadcast %cst_15 : f32 to vector<8x384xf32>
    %417 = arith.maximumf %415, %416 : vector<8x384xf32>
    %c0_16 = arith.constant 0 : index
    %c24 = arith.constant 24 : index
    %c0_17 = arith.constant 0 : index
    %418 = vector.load %arg4[%c0_16, %c24, %c0_17] : memref<1x32x384xf32, #tpu.memory_space<vmem>>, vector<1x8x384xf32>
    %419 = vector.shape_cast %418 : vector<1x8x384xf32> to vector<8x384xf32>
    %420 = vector.shape_cast %417 : vector<8x384xf32> to vector<1x8x384xf32>
    tpu.vector_store %arg4[%c0_16, %c24, %c0_17], %420 {strides = array<i32>} : memref<1x32x384xf32, #tpu.memory_space<vmem>>, vector<1x8x384xf32>,
    return
  }
  func.func @transform_0(%arg0: i32) -> (i32, i32, i32) {
    %c0_i32 = arith.constant 0 : i32
    %c0_i32_0 = arith.constant 0 : i32
    %c0_i32_1 = arith.constant 0 : i32
    return %arg0, %c0_i32, %c0_i32_0 : i32, i32, i32
  }
  func.func @transform_1(%arg0: i32) -> (i32, i32) {
    %c0_i32 = arith.constant 0 : i32
    %c0_i32_0 = arith.constant 0 : i32
    %c0_i32_1 = arith.constant 0 : i32
    return %c0_i32, %c0_i32_0 : i32, i32
  }
  func.func @transform_2(%arg0: i32) -> (i32, i32) {
    %c0_i32 = arith.constant 0 : i32
    %c0_i32_0 = arith.constant 0 : i32
    %c0_i32_1 = arith.constant 0 : i32
    return %c0_i32, %c0_i32_0 : i32, i32
  }
  func.func @transform_3(%arg0: i32) -> (i32, i32, i32) {
    %c0_i32 = arith.constant 0 : i32
    %c0_i32_0 = arith.constant 0 : i32
    %c0_i32_1 = arith.constant 0 : i32
    return %arg0, %c0_i32, %c0_i32_0 : i32, i32, i32
  }
}

</mosaic_0001>

<llo_original>
// kernel: tpu_custom_call.1
$region0: #{tpu_custom_call.1}
  #allocation0 [shape = 'u32[]', space=smem, size = 0x4, offset = 0x4, fixed_abs, tag = 'smem constant byte address 0x4 - core index']
  #allocation1 [shape = 'u32[144,128]{1,0:T(1,128)}', space=vmem, size = 0x12000, scoped, tag = 'internal scratch']
  %s0 = inlined_call_operand.hbm [shape: f32[2,4,512], index: 0, kind: input, shape index: {}]
  %s1 = inlined_call_operand.vmem [shape: f32[8,64], index: 1, kind: input, shape index: {}]
  %s2 = inlined_call_operand.vmem [shape: f32[8,1], index: 2, kind: input, shape index: {}]
  %s3 = inlined_call_operand.hbm [shape: f32[2,32,384], index: 3, kind: output, shape index: {}]
  %s4 = sld [smem:[#allocation0]]
  $region49: #{tpu_custom_call.1} parent=0
    _
  %s6 = ssub.s32 1, %s4
  %s7 = scalar_select 0, %s6, %s4
  $region1: #{tpu_custom_call.1} parent=0
    #allocation2 [shape = 'u8[16384]{0}', space=vmem, size = 0x4000, scoped, tag = 'input window, operand 0']
    #allocation3 [shape = 's32[2]{0}', space=sflag, size = 0x8, scoped, tag = 'scoped memory for tpu_custom_call.1']
    #allocation4 [shape = 's32[2]{0}', space=sflag, size = 0x8, scoped, tag = 'scoped memory for tpu_custom_call.1']
    #allocation5 [shape = 'u8[98304]{0}', space=vmem, size = 0x18000, scoped, tag = 'output window, operand 0']
    %8 = vsyncpa [#allocation3], 0
    %s9 = scalar_lea.sflag [#allocation3], 1
    %10 = vsyncpa %s9, 0
    %11 = vsyncpa [#allocation4], 0
    %s12 = scalar_lea.sflag [#allocation4], 1
    %13 = vsyncpa %s12, 0
    loop: start=0, step=1, limit=4
    $region2: #{tpu_custom_call.1} parent=1 // loop_pre_header
      _
    $region3: #{tpu_custom_call.1} parent=1 // loop_header
      %s15 = sphi 0, %s19
      %p16 = scmp.ge.s32.totalorder %s15, 4
      %s25 = sphi 0, %s27
      %s28 = sphi 0, %s25
      %s29 = sphi 0, %s28
      %s45 = sphi 0, %s29
      %s49 = sphi 0, %s49
      %s51 = sphi 0, %s49
      %s52 = sphi 0, %s51
      %s66 = sphi 0, %s52
      %s70 = sphi 0, %s70
      %s72 = sphi 0, %s70
      %s73 = sphi 0, %s72
      %s87 = sphi 0, %s73
      %s93 = sphi 0, %s95
      %s96 = sphi 0, %s93
      %s97 = sphi 0, %s96
      %s113 = sphi 0, %s97
    $region4: #{tpu_custom_call.1} parent=1 // loop_header_branch
      %18 = sbr.rel (%p16) target = $region8
    $region5: #{tpu_custom_call.1} parent=1 // loop_body
      %s20 = ssub.s32 %s15, 1
      %s21 = ssub.s32 %s15, 2
      %s22 = sadd.s32 %s15, 1
      %s23 = ssub.s32 %s15, %s22
      %p24 = scmp.eq.s32.totalorder %s23, 0
      %s26 = sadd.s32 %s25, 1
      %s27 = scalar_select %p24, %s25, %s26
      %p30 = pneg %p24
      %p31 = scmp.eq.s32.totalorder %s15, 1
      %p32 = por %p30, %p31
      %p33 = scmp.ne.s32.totalorder %s25, %s28
      %p34 = scmp.eq.s32.totalorder %s15, 0
      %p35 = por %p33, %p34
      %p36 = scmp.ne.s32.totalorder %s25, %s28
      %p37 = scmp.eq.s32.totalorder %s20, 1
      %p38 = por %p36, %p37
      %p39 = scmp.ne.s32.totalorder %s28, %s29
      %p40 = scmp.eq.s32.totalorder %s20, 0
      %p41 = por %p39, %p40
      %p42 = scmp.ne.s32.totalorder %s28, %s29
      %p43 = scmp.eq.s32.totalorder %s21, 1
      %p44 = por %p42, %p43
      %p46 = scmp.ne.s32.totalorder %s29, %s45
      %p47 = scmp.eq.s32.totalorder %s21, 0
      %p48 = por %p46, %p47
      %s50 = sadd.s32 %s49, 1
      %p53 = scmp.eq.s32.totalorder %s15, 1
      %p54 = scmp.ne.s32.totalorder %s49, %s51
      %p55 = scmp.eq.s32.totalorder %s15, 0
      %p56 = por %p54, %p55
      %p57 = scmp.ne.s32.totalorder %s49, %s51
      %p58 = scmp.eq.s32.totalorder %s20, 1
      %p59 = por %p57, %p58
      %p60 = scmp.ne.s32.totalorder %s51, %s52
      %p61 = scmp.eq.s32.totalorder %s20, 0
      %p62 = por %p60, %p61
      %p63 = scmp.ne.s32.totalorder %s51, %s52
      %p64 = scmp.eq.s32.totalorder %s21, 1
      %p65 = por %p63, %p64
      %p67 = scmp.ne.s32.totalorder %s52, %s66
      %p68 = scmp.eq.s32.totalorder %s21, 0
      %p69 = por %p67, %p68
      %s71 = sadd.s32 %s70, 1
      %p74 = scmp.eq.s32.totalorder %s15, 1
      %p75 = scmp.ne.s32.totalorder %s70, %s72
      %p76 = scmp.eq.s32.totalorder %s15, 0
      %p77 = por %p75, %p76
      %p78 = scmp.ne.s32.totalorder %s70, %s72
      %p79 = scmp.eq.s32.totalorder %s20, 1
      %p80 = por %p78, %p79
      %p81 = scmp.ne.s32.totalorder %s72, %s73
      %p82 = scmp.eq.s32.totalorder %s20, 0
      %p83 = por %p81, %p82
      %p84 = scmp.ne.s32.totalorder %s72, %s73
      %p85 = scmp.eq.s32.totalorder %s21, 1
      %p86 = por %p84, %p85
      %p88 = scmp.ne.s32.totalorder %s73, %s87
      %p89 = scmp.eq.s32.totalorder %s21, 0
      %p90 = por %p88, %p89
      %s91 = ssub.s32 %s15, %s22
      %p92 = scmp.eq.s32.totalorder %s91, 0
      %s94 = sadd.s32 %s93, 1
      %s95 = scalar_select %p92, %s93, %s94
      %p98 = pneg %p92
      %p99 = scmp.eq.s32.totalorder %s15, 1
      %p100 = por %p98, %p99
      %p101 = scmp.ne.s32.totalorder %s93, %s96
      %p102 = scmp.eq.s32.totalorder %s15, 0
      %p103 = por %p101, %p102
      %p104 = scmp.ne.s32.totalorder %s93, %s96
      %p105 = scmp.eq.s32.totalorder %s20, 1
      %p106 = por %p104, %p105
      %p107 = scmp.ne.s32.totalorder %s96, %s97
      %p108 = scmp.eq.s32.totalorder %s20, 0
      %p109 = por %p107, %p108
      %p110 = scmp.ne.s32.totalorder %s96, %s97
      %p111 = scmp.eq.s32.totalorder %s21, 1
      %p112 = por %p110, %p111
      %p114 = scmp.ne.s32.totalorder %s97, %s113
      %p115 = scmp.eq.s32.totalorder %s21, 0
      %p116 = por %p114, %p115
      %p117 = scmp.le.s32.totalorder 1, %s15
      %p118 = scmp.lt.s32.totalorder %s15, 3
      %p119 = pnand %p117, %p118
      %p120 = pneg %p119
      // Predicated region
      $region9: #{tpu_custom_call.1} parent=5 // pred_check
        _
      $region10: #{tpu_custom_call.1} parent=5 // pred_check_branch
        %122 = sbr.rel (%p119) target = $region12
      $region11: #{tpu_custom_call.1} parent=5 // pred_region
        %s123 = ssub.s32 %s15, 1
        // Predicated region
        $region13: #{tpu_custom_call.1} parent=11 // pred_check
          %p124 = pneg %p62
        $region14: #{tpu_custom_call.1} parent=11 // pred_check_branch
          %126 = sbr.rel (%p124) target = $region16
        $region15: #{tpu_custom_call.1} parent=11 // pred_region
          _
        $region16: #{tpu_custom_call.1} parent=11 // pred_fallthru
          _
        // Predicated region
        $region17: #{tpu_custom_call.1} parent=11 // pred_check
          %p127 = pneg %p83
        $region18: #{tpu_custom_call.1} parent=11 // pred_check_branch
          %129 = sbr.rel (%p127) target = $region20
        $region19: #{tpu_custom_call.1} parent=11 // pred_region
          _
        $region20: #{tpu_custom_call.1} parent=11 // pred_fallthru
          _
      $region12: #{tpu_custom_call.1} parent=5 // pred_fallthru
        _
      %p130 = scmp.lt.s32.totalorder %s15, 2
      // Predicated region
      $region21: #{tpu_custom_call.1} parent=5 // pred_check
        %p131 = pneg %p130
      $region22: #{tpu_custom_call.1} parent=5 // pred_check_branch
        %133 = sbr.rel (%p131) target = $region24
      $region23: #{tpu_custom_call.1} parent=5 // pred_region
        // Predicated region
        $region25: #{tpu_custom_call.1} parent=23 // pred_check
          %p134 = pneg %p35
        $region26: #{tpu_custom_call.1} parent=23 // pred_check_branch
          %136 = sbr.rel (%p134) target = $region28
        $region27: #{tpu_custom_call.1} parent=23 // pred_region
          %s137 = sand.u32 %s25, 1
          %s138 = scalar_lea.sflag [#allocation3], %s137
          %s139 = sand.u32 %s25, 1
          %s140 = smul.addr %s139, 16
          %s141 = scalar_lea.vmem [#allocation2], %s140
          %s143 = ssub.s32 256, 256
          %144 = vsyncadd %s138, %s143
          %s145 = smul.addr %s15, 4
          %s146 = smul.addr %s145, 64
          %s147 = scalar_lea.hbm %s0, %s146
          %s149 = sshll.u32 %s141, 4
          %s150 = int_to_ptr.vmem [resolvable:$true] %s149
          %152 = dma.hbm_to_vmem [thread:$0]  %s147, 256, %s150, %s138
        $region28: #{tpu_custom_call.1} parent=23 // pred_fallthru
          _
      $region24: #{tpu_custom_call.1} parent=5 // pred_fallthru
        _
      %p153 = scmp.le.s32.totalorder 1, %s15
      %p154 = scmp.lt.s32.totalorder %s15, 3
      %p155 = pnand %p153, %p154
      %p156 = pneg %p155
      // Predicated region
      $region29: #{tpu_custom_call.1} parent=5 // pred_check
        _
      $region30: #{tpu_custom_call.1} parent=5 // pred_check_branch
        %158 = sbr.rel (%p155) target = $region32
      $region31: #{tpu_custom_call.1} parent=5 // pred_region
        %s159 = ssub.s32 %s15, 1
        %s160 = sand.u32 %s28, 1
        %s161 = scalar_lea.sflag [#allocation3], %s160
        %s162 = sand.u32 %s28, 1
        %s163 = smul.addr %s162, 16
        %s164 = scalar_lea.vmem [#allocation2], %s163
        // Predicated region
        $region33: #{tpu_custom_call.1} parent=31 // pred_check
          %p165 = pneg %p41
        $region34: #{tpu_custom_call.1} parent=31 // pred_check_branch
          %167 = sbr.rel (%p165) target = $region36
        $region35: #{tpu_custom_call.1} parent=31 // pred_region
          %168 = dma.done %s161, 256
        $region36: #{tpu_custom_call.1} parent=31 // pred_fallthru
          _
        %s169 = sand.u32 %s28, 1
        %s170 = scalar_lea.sflag [#allocation3], %s169
        %s171 = sand.u32 %s28, 1
        %s172 = smul.addr %s171, 16
        %s173 = scalar_lea.vmem [#allocation2], %s172
        %p174 = pneg %p41
        %p175 = pneg %p38
        %p176 = pneg %p62
        %p177 = pneg %p59
        %p178 = pneg %p83
        %p179 = pneg %p80
        %p180 = pneg %p109
        %p181 = pneg %p106
        %s182 = sand.u32 %s96, 1
        %s183 = scalar_lea.sflag [#allocation4], %s182
        %s184 = sand.u32 %s96, 1
        %s185 = smul.addr %s184, 96
        %s186 = scalar_lea.vmem [#allocation5], %s185
        %v187 = vld [vmem:[%s1] sm:$0xff]
        %v188 = vld [vmem:[%s2] sm:$0xff]
        %v189 = vld [vmem:[%s164] sm:$0xff]
        %v190 = vld [vmem:[%s164 + $0x8] sm:$0xff]
        %192 = vset.pattern.permute.xlu0 0
        %193 = vperm.xlu0 %192, %v187
        %v194 = vpop.permute.xlu0 %193
        %v198 = vlaneseq
        %v199 = vshrl.u32 %v198, 7
        %v200 = vsub.s32 0, %v199
        %v201 = vrot.slane %v189, %v200
        %v202 = vlaneseq
        %v203 = vshrl.u32 %v202, 7
        %v204 = vsub.s32 4, %v203
        %v205 = vrot.slane %v189, %v204
        %v206 = vlaneseq
        %v207 = vshrl.u32 %v206, 7
        %v208 = vsub.s32 0, %v207
        %v209 = vrot.slane %v190, %v208
        %v213 = vlaneseq
        %v214 = vshrl.u32 %v213, 7
        %v215 = vsub.s32 0, %v214
        %v216 = vrot.slane %v201, %v215
        %v217 = vlaneseq
        %v218 = vshrl.u32 %v217, 7
        %v219 = vsub.s32 0, %v218
        %v220 = vrot.slane %v205, %v219
        %v221 = vlaneseq
        %v222 = vshrl.u32 %v221, 7
        %v223 = vsub.s32 0, %v222
        %v224 = vrot.slane %v209, %v223
        %v225 = vmul.f32 %v194, %v216
        %v226 = vmul.f32 %v194, %v220
        %v227 = vmul.f32 %v194, %v224
        %228 = vset.pattern.permute.xlu0 1
        %229 = vperm.xlu0 %228, %v187
        %v230 = vpop.permute.xlu0 %229
        %v232 = vlaneseq
        %v233 = vshrl.u32 %v232, 7
        %v234 = vsub.s32 1, %v233
        %v235 = vrot.slane %v189, %v234
        %v236 = vlaneseq
        %v237 = vshrl.u32 %v236, 7
        %v238 = vsub.s32 5, %v237
        %v239 = vrot.slane %v189, %v238
        %v240 = vlaneseq
        %v241 = vshrl.u32 %v240, 7
        %v242 = vsub.s32 1, %v241
        %v243 = vrot.slane %v190, %v242
        %v247 = vlaneseq
        %v248 = vshrl.u32 %v247, 7
        %v249 = vsub.s32 1, %v248
        %v250 = vrot.slane %v235, %v249
        %v251 = vlaneseq
        %v252 = vshrl.u32 %v251, 7
        %v253 = vsub.s32 1, %v252
        %v254 = vrot.slane %v239, %v253
        %v255 = vlaneseq
        %v256 = vshrl.u32 %v255, 7
        %v257 = vsub.s32 1, %v256
        %v258 = vrot.slane %v243, %v257
        %v259 = vmul.f32 %v230, %v250
        %v260 = vmul.f32 %v230, %v254
        %v261 = vmul.f32 %v230, %v258
        %v262 = vadd.f32 %v225, %v259
        %v263 = vadd.f32 %v226, %v260
        %v264 = vadd.f32 %v227, %v261
        %265 = vset.pattern.permute.xlu0 2
        %266 = vperm.xlu0 %265, %v187
        %v267 = vpop.permute.xlu0 %266
        %v269 = vlaneseq
        %v270 = vshrl.u32 %v269, 7
        %v271 = vsub.s32 2, %v270
        %v272 = vrot.slane %v189, %v271
        %v273 = vlaneseq
        %v274 = vshrl.u32 %v273, 7
        %v275 = vsub.s32 6, %v274
        %v276 = vrot.slane %v189, %v275
        %v277 = vlaneseq
        %v278 = vshrl.u32 %v277, 7
        %v279 = vsub.s32 2, %v278
        %v280 = vrot.slane %v190, %v279
        %v284 = vlaneseq
        %v285 = vshrl.u32 %v284, 7
        %v286 = vsub.s32 2, %v285
        %v287 = vrot.slane %v272, %v286
        %v288 = vlaneseq
        %v289 = vshrl.u32 %v288, 7
        %v290 = vsub.s32 2, %v289
        %v291 = vrot.slane %v276, %v290
        %v292 = vlaneseq
        %v293 = vshrl.u32 %v292, 7
        %v294 = vsub.s32 2, %v293
        %v295 = vrot.slane %v280, %v294
        %v296 = vmul.f32 %v267, %v287
        %v297 = vmul.f32 %v267, %v291
        %v298 = vmul.f32 %v267, %v295
        %v299 = vadd.f32 %v262, %v296
        %v300 = vadd.f32 %v263, %v297
        %v301 = vadd.f32 %v264, %v298
        %302 = vset.pattern.permute.xlu0 3
        %303 = vperm.xlu0 %302, %v187
        %v304 = vpop.permute.xlu0 %303
        %v306 = vlaneseq
        %v307 = vshrl.u32 %v306, 7
        %v308 = vsub.s32 3, %v307
        %v309 = vrot.slane %v189, %v308
        %v310 = vlaneseq
        %v311 = vshrl.u32 %v310, 7
        %v312 = vsub.s32 7, %v311
        %v313 = vrot.slane %v189, %v312
        %v314 = vlaneseq
        %v315 = vshrl.u32 %v314, 7
        %v316 = vsub.s32 3, %v315
        %v317 = vrot.slane %v190, %v316
        %v321 = vlaneseq
        %v322 = vshrl.u32 %v321, 7
        %v323 = vsub.s32 3, %v322
        %v324 = vrot.slane %v309, %v323
        %v325 = vlaneseq
        %v326 = vshrl.u32 %v325, 7
        %v327 = vsub.s32 3, %v326
        %v328 = vrot.slane %v313, %v327
        %v329 = vlaneseq
        %v330 = vshrl.u32 %v329, 7
        %v331 = vsub.s32 3, %v330
        %v332 = vrot.slane %v317, %v331
        %v333 = vmul.f32 %v304, %v324
        %v334 = vmul.f32 %v304, %v328
        %v335 = vmul.f32 %v304, %v332
        %v336 = vadd.f32 %v299, %v333
        %v337 = vadd.f32 %v300, %v334
        %v338 = vadd.f32 %v301, %v335
        %339 = vset.pattern.permute.xlu0 4
        %340 = vperm.xlu0 %339, %v187
        %v341 = vpop.permute.xlu0 %340
        %v343 = vlaneseq
        %v344 = vshrl.u32 %v343, 7
        %v345 = vsub.s32 4, %v344
        %v346 = vrot.slane %v190, %v345
        %v348 = vlaneseq
        %v349 = vshrl.u32 %v348, 7
        %v350 = vsub.s32 0, %v349
        %v351 = vrot.slane %v346, %v350
        %v352 = vmul.f32 %v341, %v216
        %v353 = vmul.f32 %v341, %v220
        %v354 = vmul.f32 %v341, %v224
        %v355 = vmul.f32 %v341, %v351
        %360 = vrot.lane.b32.xlu0 %v352, 127
        %v361 = vpop.permute.xlu0 %360
        %362 = vrot.lane.b32.xlu0 %v353, 127
        %v363 = vpop.permute.xlu0 %362
        %364 = vrot.lane.b32.xlu0 %v354, 127
        %v365 = vpop.permute.xlu0 %364
        %366 = vrot.lane.b32.xlu0 %v355, 127
        %v367 = vpop.permute.xlu0 %366
        %vm368 = vcmask 1039360
        %v369 = vsel %vm368, %v361, %v363
        %v370 = vsel %vm368, %v363, %v365
        %v371 = vsel %vm368, %v365, %v367
        %v375 = vadd.f32 %v336, %v369
        %v376 = vadd.f32 %v337, %v370
        %v377 = vadd.f32 %v338, %v371
        %378 = vset.pattern.permute.xlu0 5
        %379 = vperm.xlu0 %378, %v187
        %v380 = vpop.permute.xlu0 %379
        %v382 = vlaneseq
        %v383 = vshrl.u32 %v382, 7
        %v384 = vsub.s32 5, %v383
        %v385 = vrot.slane %v190, %v384
        %v387 = vlaneseq
        %v388 = vshrl.u32 %v387, 7
        %v389 = vsub.s32 1, %v388
        %v390 = vrot.slane %v385, %v389
        %v391 = vmul.f32 %v380, %v250
        %v392 = vmul.f32 %v380, %v254
        %v393 = vmul.f32 %v380, %v258
        %v394 = vmul.f32 %v380, %v390
        %399 = vrot.lane.b32.xlu0 %v391, 127
        %v400 = vpop.permute.xlu0 %399
        %401 = vrot.lane.b32.xlu0 %v392, 127
        %v402 = vpop.permute.xlu0 %401
        %403 = vrot.lane.b32.xlu0 %v393, 127
        %v404 = vpop.permute.xlu0 %403
        %405 = vrot.lane.b32.xlu0 %v394, 127
        %v406 = vpop.permute.xlu0 %405
        %v407 = vsel %vm368, %v400, %v402
        %v408 = vsel %vm368, %v402, %v404
        %v409 = vsel %vm368, %v404, %v406
        %v413 = vadd.f32 %v375, %v407
        %v414 = vadd.f32 %v376, %v408
        %v415 = vadd.f32 %v377, %v409
        %416 = vset.pattern.permute.xlu0 6
        %417 = vperm.xlu0 %416, %v187
        %v418 = vpop.permute.xlu0 %417
        %v420 = vlaneseq
        %v421 = vshrl.u32 %v420, 7
        %v422 = vsub.s32 6, %v421
        %v423 = vrot.slane %v190, %v422
        %v425 = vlaneseq
        %v426 = vshrl.u32 %v425, 7
        %v427 = vsub.s32 2, %v426
        %v428 = vrot.slane %v423, %v427
        %v429 = vmul.f32 %v418, %v287
        %v430 = vmul.f32 %v418, %v291
        %v431 = vmul.f32 %v418, %v295
        %v432 = vmul.f32 %v418, %v428
        %437 = vrot.lane.b32.xlu0 %v429, 127
        %v438 = vpop.permute.xlu0 %437
        %439 = vrot.lane.b32.xlu0 %v430, 127
        %v440 = vpop.permute.xlu0 %439
        %441 = vrot.lane.b32.xlu0 %v431, 127
        %v442 = vpop.permute.xlu0 %441
        %443 = vrot.lane.b32.xlu0 %v432, 127
        %v444 = vpop.permute.xlu0 %443
        %v445 = vsel %vm368, %v438, %v440
        %v446 = vsel %vm368, %v440, %v442
        %v447 = vsel %vm368, %v442, %v444
        %v451 = vadd.f32 %v413, %v445
        %v452 = vadd.f32 %v414, %v446
        %v453 = vadd.f32 %v415, %v447
        %454 = vset.pattern.permute.xlu0 7
        %455 = vperm.xlu0 %454, %v187
        %v456 = vpop.permute.xlu0 %455
        %v458 = vlaneseq
        %v459 = vshrl.u32 %v458, 7
        %v460 = vsub.s32 7, %v459
        %v461 = vrot.slane %v190, %v460
        %v463 = vlaneseq
        %v464 = vshrl.u32 %v463, 7
        %v465 = vsub.s32 3, %v464
        %v466 = vrot.slane %v461, %v465
        %v467 = vmul.f32 %v456, %v324
        %v468 = vmul.f32 %v456, %v328
        %v469 = vmul.f32 %v456, %v332
        %v470 = vmul.f32 %v456, %v466
        %475 = vrot.lane.b32.xlu0 %v467, 127
        %v476 = vpop.permute.xlu0 %475
        %477 = vrot.lane.b32.xlu0 %v468, 127
        %v478 = vpop.permute.xlu0 %477
        %479 = vrot.lane.b32.xlu0 %v469, 127
        %v480 = vpop.permute.xlu0 %479
        %481 = vrot.lane.b32.xlu0 %v470, 127
        %v482 = vpop.permute.xlu0 %481
        %v483 = vsel %vm368, %v476, %v478
        %v484 = vsel %vm368, %v478, %v480
        %v485 = vsel %vm368, %v480, %v482
        %v489 = vadd.f32 %v451, %v483
        %v490 = vadd.f32 %v452, %v484
        %v491 = vadd.f32 %v453, %v485
        %492 = vset.pattern.permute.xlu0 8
        %493 = vperm.xlu0 %492, %v187
        %v494 = vpop.permute.xlu0 %493
        %v496 = vmul.f32 %v494, %v216
        %v497 = vmul.f32 %v494, %v220
        %v498 = vmul.f32 %v494, %v224
        %v499 = vmul.f32 %v494, %v351
        %504 = vrot.lane.b32.xlu0 %v496, 110
        %v505 = vpop.permute.xlu0 %504
        %506 = vrot.lane.b32.xlu0 %v497, 110
        %v507 = vpop.permute.xlu0 %506
        %508 = vrot.lane.b32.xlu0 %v498, 110
        %v509 = vpop.permute.xlu0 %508
        %510 = vrot.lane.b32.xlu0 %v499, 110
        %v511 = vpop.permute.xlu0 %510
        %vm512 = vcmask 900096
        %v513 = vsel %vm512, %v505, %v507
        %v514 = vsel %vm512, %v507, %v509
        %v515 = vsel %vm512, %v509, %v511
        %v519 = vadd.f32 %v489, %v513
        %v520 = vadd.f32 %v490, %v514
        %v521 = vadd.f32 %v491, %v515
        %522 = vset.pattern.permute.xlu0 9
        %523 = vperm.xlu0 %522, %v187
        %v524 = vpop.permute.xlu0 %523
        %v526 = vmul.f32 %v524, %v250
        %v527 = vmul.f32 %v524, %v254
        %v528 = vmul.f32 %v524, %v258
        %v529 = vmul.f32 %v524, %v390
        %534 = vrot.lane.b32.xlu0 %v526, 110
        %v535 = vpop.permute.xlu0 %534
        %536 = vrot.lane.b32.xlu0 %v527, 110
        %v537 = vpop.permute.xlu0 %536
        %538 = vrot.lane.b32.xlu0 %v528, 110
        %v539 = vpop.permute.xlu0 %538
        %540 = vrot.lane.b32.xlu0 %v529, 110
        %v541 = vpop.permute.xlu0 %540
        %v542 = vsel %vm512, %v535, %v537
        %v543 = vsel %vm512, %v537, %v539
        %v544 = vsel %vm512, %v539, %v541
        %v548 = vadd.f32 %v519, %v542
        %v549 = vadd.f32 %v520, %v543
        %v550 = vadd.f32 %v521, %v544
        %551 = vset.pattern.permute.xlu0 10
        %552 = vperm.xlu0 %551, %v187
        %v553 = vpop.permute.xlu0 %552
        %v555 = vmul.f32 %v553, %v287
        %v556 = vmul.f32 %v553, %v291
        %v557 = vmul.f32 %v553, %v295
        %v558 = vmul.f32 %v553, %v428
        %563 = vrot.lane.b32.xlu0 %v555, 110
        %v564 = vpop.permute.xlu0 %563
        %565 = vrot.lane.b32.xlu0 %v556, 110
        %v566 = vpop.permute.xlu0 %565
        %567 = vrot.lane.b32.xlu0 %v557, 110
        %v568 = vpop.permute.xlu0 %567
        %569 = vrot.lane.b32.xlu0 %v558, 110
        %v570 = vpop.permute.xlu0 %569
        %v571 = vsel %vm512, %v564, %v566
        %v572 = vsel %vm512, %v566, %v568
        %v573 = vsel %vm512, %v568, %v570
        %v577 = vadd.f32 %v548, %v571
        %v578 = vadd.f32 %v549, %v572
        %v579 = vadd.f32 %v550, %v573
        %580 = vset.pattern.permute.xlu0 11
        %581 = vperm.xlu0 %580, %v187
        %v582 = vpop.permute.xlu0 %581
        %v584 = vmul.f32 %v582, %v324
        %v585 = vmul.f32 %v582, %v328
        %v586 = vmul.f32 %v582, %v332
        %v587 = vmul.f32 %v582, %v466
        %592 = vrot.lane.b32.xlu0 %v584, 110
        %v593 = vpop.permute.xlu0 %592
        %594 = vrot.lane.b32.xlu0 %v585, 110
        %v595 = vpop.permute.xlu0 %594
        %596 = vrot.lane.b32.xlu0 %v586, 110
        %v597 = vpop.permute.xlu0 %596
        %598 = vrot.lane.b32.xlu0 %v587, 110
        %v599 = vpop.permute.xlu0 %598
        %v600 = vsel %vm512, %v593, %v595
        %v601 = vsel %vm512, %v595, %v597
        %v602 = vsel %vm512, %v597, %v599
        %v606 = vadd.f32 %v577, %v600
        %v607 = vadd.f32 %v578, %v601
        %v608 = vadd.f32 %v579, %v602
        %609 = vset.pattern.permute.xlu0 12
        %610 = vperm.xlu0 %609, %v187
        %v611 = vpop.permute.xlu0 %610
        %v613 = vmul.f32 %v611, %v216
        %v614 = vmul.f32 %v611, %v220
        %v615 = vmul.f32 %v611, %v224
        %v616 = vmul.f32 %v611, %v351
        %621 = vrot.lane.b32.xlu0 %v613, 109
        %v622 = vpop.permute.xlu0 %621
        %623 = vrot.lane.b32.xlu0 %v614, 109
        %v624 = vpop.permute.xlu0 %623
        %625 = vrot.lane.b32.xlu0 %v615, 109
        %v626 = vpop.permute.xlu0 %625
        %627 = vrot.lane.b32.xlu0 %v616, 109
        %v628 = vpop.permute.xlu0 %627
        %vm629 = vcmask 891904
        %v630 = vsel %vm629, %v622, %v624
        %v631 = vsel %vm629, %v624, %v626
        %v632 = vsel %vm629, %v626, %v628
        %v636 = vadd.f32 %v606, %v630
        %v637 = vadd.f32 %v607, %v631
        %v638 = vadd.f32 %v608, %v632
        %639 = vset.pattern.permute.xlu0 13
        %640 = vperm.xlu0 %639, %v187
        %v641 = vpop.permute.xlu0 %640
        %v643 = vmul.f32 %v641, %v250
        %v644 = vmul.f32 %v641, %v254
        %v645 = vmul.f32 %v641, %v258
        %v646 = vmul.f32 %v641, %v390
        %651 = vrot.lane.b32.xlu0 %v643, 109
        %v652 = vpop.permute.xlu0 %651
        %653 = vrot.lane.b32.xlu0 %v644, 109
        %v654 = vpop.permute.xlu0 %653
        %655 = vrot.lane.b32.xlu0 %v645, 109
        %v656 = vpop.permute.xlu0 %655
        %657 = vrot.lane.b32.xlu0 %v646, 109
        %v658 = vpop.permute.xlu0 %657
        %v659 = vsel %vm629, %v652, %v654
        %v660 = vsel %vm629, %v654, %v656
        %v661 = vsel %vm629, %v656, %v658
        %v665 = vadd.f32 %v636, %v659
        %v666 = vadd.f32 %v637, %v660
        %v667 = vadd.f32 %v638, %v661
        %668 = vset.pattern.permute.xlu0 14
        %669 = vperm.xlu0 %668, %v187
        %v670 = vpop.permute.xlu0 %669
        %v672 = vmul.f32 %v670, %v287
        %v673 = vmul.f32 %v670, %v291
        %v674 = vmul.f32 %v670, %v295
        %v675 = vmul.f32 %v670, %v428
        %680 = vrot.lane.b32.xlu0 %v672, 109
        %v681 = vpop.permute.xlu0 %680
        %682 = vrot.lane.b32.xlu0 %v673, 109
        %v683 = vpop.permute.xlu0 %682
        %684 = vrot.lane.b32.xlu0 %v674, 109
        %v685 = vpop.permute.xlu0 %684
        %686 = vrot.lane.b32.xlu0 %v675, 109
        %v687 = vpop.permute.xlu0 %686
        %v688 = vsel %vm629, %v681, %v683
        %v689 = vsel %vm629, %v683, %v685
        %v690 = vsel %vm629, %v685, %v687
        %v694 = vadd.f32 %v665, %v688
        %v695 = vadd.f32 %v666, %v689
        %v696 = vadd.f32 %v667, %v690
        %697 = vset.pattern.permute.xlu0 15
        %698 = vperm.xlu0 %697, %v187
        %v699 = vpop.permute.xlu0 %698
        %v701 = vmul.f32 %v699, %v324
        %v702 = vmul.f32 %v699, %v328
        %v703 = vmul.f32 %v699, %v332
        %v704 = vmul.f32 %v699, %v466
        %709 = vrot.lane.b32.xlu0 %v701, 109
        %v710 = vpop.permute.xlu0 %709
        %711 = vrot.lane.b32.xlu0 %v702, 109
        %v712 = vpop.permute.xlu0 %711
        %713 = vrot.lane.b32.xlu0 %v703, 109
        %v714 = vpop.permute.xlu0 %713
        %715 = vrot.lane.b32.xlu0 %v704, 109
        %v716 = vpop.permute.xlu0 %715
        %v717 = vsel %vm629, %v710, %v712
        %v718 = vsel %vm629, %v712, %v714
        %v719 = vsel %vm629, %v714, %v716
        %v723 = vadd.f32 %v694, %v717
        %v724 = vadd.f32 %v695, %v718
        %v725 = vadd.f32 %v696, %v719
        %727 = vset.pattern.permute.xlu0 0
        %728 = vperm.xlu0 %727, %v188
        %v729 = vpop.permute.xlu0 %728
        %v731 = vadd.f32 %v723, %v729
        %v732 = vadd.f32 %v724, %v729
        %v733 = vadd.f32 %v725, %v729
        %v734 = vmax.f32 %v731, 0.0
        %v735 = vmax.f32 %v732, 0.0
        %v736 = vmax.f32 %v733, 0.0
        %737 = vst [vmem:[%s186] sm:$0xff] %v734
        %738 = vst [vmem:[%s186 + $0x8] sm:$0xff] %v735
        %739 = vst [vmem:[%s186 + $0x10] sm:$0xff] %v736
        %740 = vset.pattern.permute.xlu0 16
        %741 = vperm.xlu0 %740, %v187
        %v742 = vpop.permute.xlu0 %741
        %v744 = vmul.f32 %v742, %v216
        %v745 = vmul.f32 %v742, %v220
        %v746 = vmul.f32 %v742, %v224
        %v747 = vmul.f32 %v742, %v351
        %748 = vset.pattern.permute.xlu0 17
        %749 = vperm.xlu0 %748, %v187
        %v750 = vpop.permute.xlu0 %749
        %v752 = vmul.f32 %v750, %v250
        %v753 = vmul.f32 %v750, %v254
        %v754 = vmul.f32 %v750, %v258
        %v755 = vmul.f32 %v750, %v390
        %v756 = vadd.f32 %v744, %v752
        %v757 = vadd.f32 %v745, %v753
        %v758 = vadd.f32 %v746, %v754
        %v759 = vadd.f32 %v747, %v755
        %760 = vset.pattern.permute.xlu0 18
        %761 = vperm.xlu0 %760, %v187
        %v762 = vpop.permute.xlu0 %761
        %v764 = vmul.f32 %v762, %v287
        %v765 = vmul.f32 %v762, %v291
        %v766 = vmul.f32 %v762, %v295
        %v767 = vmul.f32 %v762, %v428
        %v768 = vadd.f32 %v756, %v764
        %v769 = vadd.f32 %v757, %v765
        %v770 = vadd.f32 %v758, %v766
        %v771 = vadd.f32 %v759, %v767
        %772 = vset.pattern.permute.xlu0 19
        %773 = vperm.xlu0 %772, %v187
        %v774 = vpop.permute.xlu0 %773
        %v776 = vmul.f32 %v774, %v324
        %v777 = vmul.f32 %v774, %v328
        %v778 = vmul.f32 %v774, %v332
        %v779 = vmul.f32 %v774, %v466
        %v780 = vadd.f32 %v768, %v776
        %v781 = vadd.f32 %v769, %v777
        %v782 = vadd.f32 %v770, %v778
        %v783 = vadd.f32 %v771, %v779
        %784 = vset.pattern.permute.xlu0 20
        %785 = vperm.xlu0 %784, %v187
        %v786 = vpop.permute.xlu0 %785
        %v788 = vmul.f32 %v786, %v216
        %v789 = vmul.f32 %v786, %v220
        %v790 = vmul.f32 %v786, %v224
        %v791 = vmul.f32 %v786, %v351
        %796 = vrot.lane.b32.xlu0 %v788, 127
        %v797 = vpop.permute.xlu0 %796
        %798 = vrot.lane.b32.xlu0 %v789, 127
        %v799 = vpop.permute.xlu0 %798
        %800 = vrot.lane.b32.xlu0 %v790, 127
        %v801 = vpop.permute.xlu0 %800
        %802 = vrot.lane.b32.xlu0 %v791, 127
        %v803 = vpop.permute.xlu0 %802
        %v804 = vsel %vm368, %v797, %v799
        %v805 = vsel %vm368, %v799, %v801
        %v806 = vsel %vm368, %v801, %v803
        %v811 = vadd.f32 %v780, %v804
        %v812 = vadd.f32 %v781, %v805
        %v813 = vadd.f32 %v782, %v806
        %v814 = vadd.f32 %v783, %v803
        %815 = vset.pattern.permute.xlu0 21
        %816 = vperm.xlu0 %815, %v187
        %v817 = vpop.permute.xlu0 %816
        %v819 = vmul.f32 %v817, %v250
        %v820 = vmul.f32 %v817, %v254
        %v821 = vmul.f32 %v817, %v258
        %v822 = vmul.f32 %v817, %v390
        %827 = vrot.lane.b32.xlu0 %v819, 127
        %v828 = vpop.permute.xlu0 %827
        %829 = vrot.lane.b32.xlu0 %v820, 127
        %v830 = vpop.permute.xlu0 %829
        %831 = vrot.lane.b32.xlu0 %v821, 127
        %v832 = vpop.permute.xlu0 %831
        %833 = vrot.lane.b32.xlu0 %v822, 127
        %v834 = vpop.permute.xlu0 %833
        %v835 = vsel %vm368, %v828, %v830
        %v836 = vsel %vm368, %v830, %v832
        %v837 = vsel %vm368, %v832, %v834
        %v842 = vadd.f32 %v811, %v835
        %v843 = vadd.f32 %v812, %v836
        %v844 = vadd.f32 %v813, %v837
        %v845 = vadd.f32 %v814, %v834
        %846 = vset.pattern.permute.xlu0 22
        %847 = vperm.xlu0 %846, %v187
        %v848 = vpop.permute.xlu0 %847
        %v850 = vmul.f32 %v848, %v287
        %v851 = vmul.f32 %v848, %v291
        %v852 = vmul.f32 %v848, %v295
        %v853 = vmul.f32 %v848, %v428
        %858 = vrot.lane.b32.xlu0 %v850, 127
        %v859 = vpop.permute.xlu0 %858
        %860 = vrot.lane.b32.xlu0 %v851, 127
        %v861 = vpop.permute.xlu0 %860
        %862 = vrot.lane.b32.xlu0 %v852, 127
        %v863 = vpop.permute.xlu0 %862
        %864 = vrot.lane.b32.xlu0 %v853, 127
        %v865 = vpop.permute.xlu0 %864
        %v866 = vsel %vm368, %v859, %v861
        %v867 = vsel %vm368, %v861, %v863
        %v868 = vsel %vm368, %v863, %v865
        %v873 = vadd.f32 %v842, %v866
        %v874 = vadd.f32 %v843, %v867
        %v875 = vadd.f32 %v844, %v868
        %v876 = vadd.f32 %v845, %v865
        %877 = vset.pattern.permute.xlu0 23
        %878 = vperm.xlu0 %877, %v187
        %v879 = vpop.permute.xlu0 %878
        %v881 = vmul.f32 %v879, %v324
        %v882 = vmul.f32 %v879, %v328
        %v883 = vmul.f32 %v879, %v332
        %v884 = vmul.f32 %v879, %v466
        %889 = vrot.lane.b32.xlu0 %v881, 127
        %v890 = vpop.permute.xlu0 %889
        %891 = vrot.lane.b32.xlu0 %v882, 127
        %v892 = vpop.permute.xlu0 %891
        %893 = vrot.lane.b32.xlu0 %v883, 127
        %v894 = vpop.permute.xlu0 %893
        %895 = vrot.lane.b32.xlu0 %v884, 127
        %v896 = vpop.permute.xlu0 %895
        %v897 = vsel %vm368, %v890, %v892
        %v898 = vsel %vm368, %v892, %v894
        %v899 = vsel %vm368, %v894, %v896
        %v904 = vadd.f32 %v873, %v897
        %v905 = vadd.f32 %v874, %v898
        %v906 = vadd.f32 %v875, %v899
        %v907 = vadd.f32 %v876, %v896
        %908 = vset.pattern.permute.xlu0 24
        %909 = vperm.xlu0 %908, %v187
        %v910 = vpop.permute.xlu0 %909
        %v912 = vmul.f32 %v910, %v216
        %v913 = vmul.f32 %v910, %v220
        %v914 = vmul.f32 %v910, %v224
        %v915 = vmul.f32 %v910, %v351
        %920 = vrot.lane.b32.xlu0 %v912, 110
        %v921 = vpop.permute.xlu0 %920
        %922 = vrot.lane.b32.xlu0 %v913, 110
        %v923 = vpop.permute.xlu0 %922
        %924 = vrot.lane.b32.xlu0 %v914, 110
        %v925 = vpop.permute.xlu0 %924
        %926 = vrot.lane.b32.xlu0 %v915, 110
        %v927 = vpop.permute.xlu0 %926
        %v928 = vsel %vm512, %v921, %v923
        %v929 = vsel %vm512, %v923, %v925
        %v930 = vsel %vm512, %v925, %v927
        %v935 = vadd.f32 %v904, %v928
        %v936 = vadd.f32 %v905, %v929
        %v937 = vadd.f32 %v906, %v930
        %v938 = vadd.f32 %v907, %v927
        %939 = vset.pattern.permute.xlu0 25
        %940 = vperm.xlu0 %939, %v187
        %v941 = vpop.permute.xlu0 %940
        %v943 = vmul.f32 %v941, %v250
        %v944 = vmul.f32 %v941, %v254
        %v945 = vmul.f32 %v941, %v258
        %v946 = vmul.f32 %v941, %v390
        %951 = vrot.lane.b32.xlu0 %v943, 110
        %v952 = vpop.permute.xlu0 %951
        %953 = vrot.lane.b32.xlu0 %v944, 110
        %v954 = vpop.permute.xlu0 %953
        %955 = vrot.lane.b32.xlu0 %v945, 110
        %v956 = vpop.permute.xlu0 %955
        %957 = vrot.lane.b32.xlu0 %v946, 110
        %v958 = vpop.permute.xlu0 %957
        %v959 = vsel %vm512, %v952, %v954
        %v960 = vsel %vm512, %v954, %v956
        %v961 = vsel %vm512, %v956, %v958
        %v966 = vadd.f32 %v935, %v959
        %v967 = vadd.f32 %v936, %v960
        %v968 = vadd.f32 %v937, %v961
        %v969 = vadd.f32 %v938, %v958
        %970 = vset.pattern.permute.xlu0 26
        %971 = vperm.xlu0 %970, %v187
        %v972 = vpop.permute.xlu0 %971
        %v974 = vmul.f32 %v972, %v287
        %v975 = vmul.f32 %v972, %v291
        %v976 = vmul.f32 %v972, %v295
        %v977 = vmul.f32 %v972, %v428
        %982 = vrot.lane.b32.xlu0 %v974, 110
        %v983 = vpop.permute.xlu0 %982
        %984 = vrot.lane.b32.xlu0 %v975, 110
        %v985 = vpop.permute.xlu0 %984
        %986 = vrot.lane.b32.xlu0 %v976, 110
        %v987 = vpop.permute.xlu0 %986
        %988 = vrot.lane.b32.xlu0 %v977, 110
        %v989 = vpop.permute.xlu0 %988
        %v990 = vsel %vm512, %v983, %v985
        %v991 = vsel %vm512, %v985, %v987
        %v992 = vsel %vm512, %v987, %v989
        %v997 = vadd.f32 %v966, %v990
        %v998 = vadd.f32 %v967, %v991
        %v999 = vadd.f32 %v968, %v992
        %v1000 = vadd.f32 %v969, %v989
        %1001 = vset.pattern.permute.xlu0 27
        %1002 = vperm.xlu0 %1001, %v187
        %v1003 = vpop.permute.xlu0 %1002
        %v1005 = vmul.f32 %v1003, %v324
        %v1006 = vmul.f32 %v1003, %v328
        %v1007 = vmul.f32 %v1003, %v332
        %v1008 = vmul.f32 %v1003, %v466
        %1013 = vrot.lane.b32.xlu0 %v1005, 110
        %v1014 = vpop.permute.xlu0 %1013
        %1015 = vrot.lane.b32.xlu0 %v1006, 110
        %v1016 = vpop.permute.xlu0 %1015
        %1017 = vrot.lane.b32.xlu0 %v1007, 110
        %v1018 = vpop.permute.xlu0 %1017
        %1019 = vrot.lane.b32.xlu0 %v1008, 110
        %v1020 = vpop.permute.xlu0 %1019
        %v1021 = vsel %vm512, %v1014, %v1016
        %v1022 = vsel %vm512, %v1016, %v1018
        %v1023 = vsel %vm512, %v1018, %v1020
        %v1028 = vadd.f32 %v997, %v1021
        %v1029 = vadd.f32 %v998, %v1022
        %v1030 = vadd.f32 %v999, %v1023
        %v1031 = vadd.f32 %v1000, %v1020
        %1032 = vset.pattern.permute.xlu0 28
        %1033 = vperm.xlu0 %1032, %v187
        %v1034 = vpop.permute.xlu0 %1033
        %v1036 = vmul.f32 %v1034, %v216
        %v1037 = vmul.f32 %v1034, %v220
        %v1038 = vmul.f32 %v1034, %v224
        %v1039 = vmul.f32 %v1034, %v351
        %1044 = vrot.lane.b32.xlu0 %v1036, 109
        %v1045 = vpop.permute.xlu0 %1044
        %1046 = vrot.lane.b32.xlu0 %v1037, 109
        %v1047 = vpop.permute.xlu0 %1046
        %1048 = vrot.lane.b32.xlu0 %v1038, 109
        %v1049 = vpop.permute.xlu0 %1048
        %1050 = vrot.lane.b32.xlu0 %v1039, 109
        %v1051 = vpop.permute.xlu0 %1050
        %v1052 = vsel %vm629, %v1045, %v1047
        %v1053 = vsel %vm629, %v1047, %v1049
        %v1054 = vsel %vm629, %v1049, %v1051
        %v1059 = vadd.f32 %v1028, %v1052
        %v1060 = vadd.f32 %v1029, %v1053
        %v1061 = vadd.f32 %v1030, %v1054
        %v1062 = vadd.f32 %v1031, %v1051
        %1063 = vset.pattern.permute.xlu0 29
        %1064 = vperm.xlu0 %1063, %v187
        %v1065 = vpop.permute.xlu0 %1064
        %v1067 = vmul.f32 %v1065, %v250
        %v1068 = vmul.f32 %v1065, %v254
        %v1069 = vmul.f32 %v1065, %v258
        %v1070 = vmul.f32 %v1065, %v390
        %1075 = vrot.lane.b32.xlu0 %v1067, 109
        %v1076 = vpop.permute.xlu0 %1075
        %1077 = vrot.lane.b32.xlu0 %v1068, 109
        %v1078 = vpop.permute.xlu0 %1077
        %1079 = vrot.lane.b32.xlu0 %v1069, 109
        %v1080 = vpop.permute.xlu0 %1079
        %1081 = vrot.lane.b32.xlu0 %v1070, 109
        %v1082 = vpop.permute.xlu0 %1081
        %v1083 = vsel %vm629, %v1076, %v1078
        %v1084 = vsel %vm629, %v1078, %v1080
        %v1085 = vsel %vm629, %v1080, %v1082
        %v1090 = vadd.f32 %v1059, %v1083
        %v1091 = vadd.f32 %v1060, %v1084
        %v1092 = vadd.f32 %v1061, %v1085
        %v1093 = vadd.f32 %v1062, %v1082
        %1094 = vset.pattern.permute.xlu0 30
        %1095 = vperm.xlu0 %1094, %v187
        %v1096 = vpop.permute.xlu0 %1095
        %v1098 = vmul.f32 %v1096, %v287
        %v1099 = vmul.f32 %v1096, %v291
        %v1100 = vmul.f32 %v1096, %v295
        %v1101 = vmul.f32 %v1096, %v428
        %1106 = vrot.lane.b32.xlu0 %v1098, 109
        %v1107 = vpop.permute.xlu0 %1106
        %1108 = vrot.lane.b32.xlu0 %v1099, 109
        %v1109 = vpop.permute.xlu0 %1108
        %1110 = vrot.lane.b32.xlu0 %v1100, 109
        %v1111 = vpop.permute.xlu0 %1110
        %1112 = vrot.lane.b32.xlu0 %v1101, 109
        %v1113 = vpop.permute.xlu0 %1112
        %v1114 = vsel %vm629, %v1107, %v1109
        %v1115 = vsel %vm629, %v1109, %v1111
        %v1116 = vsel %vm629, %v1111, %v1113
        %v1121 = vadd.f32 %v1090, %v1114
        %v1122 = vadd.f32 %v1091, %v1115
        %v1123 = vadd.f32 %v1092, %v1116
        %v1124 = vadd.f32 %v1093, %v1113
        %1125 = vset.pattern.permute.xlu0 31
        %1126 = vperm.xlu0 %1125, %v187
        %v1127 = vpop.permute.xlu0 %1126
        %v1129 = vmul.f32 %v1127, %v324
        %v1130 = vmul.f32 %v1127, %v328
        %v1131 = vmul.f32 %v1127, %v332
        %v1132 = vmul.f32 %v1127, %v466
        %1137 = vrot.lane.b32.xlu0 %v1129, 109
        %v1138 = vpop.permute.xlu0 %1137
        %1139 = vrot.lane.b32.xlu0 %v1130, 109
        %v1140 = vpop.permute.xlu0 %1139
        %1141 = vrot.lane.b32.xlu0 %v1131, 109
        %v1142 = vpop.permute.xlu0 %1141
        %1143 = vrot.lane.b32.xlu0 %v1132, 109
        %v1144 = vpop.permute.xlu0 %1143
        %v1145 = vsel %vm629, %v1138, %v1140
        %v1146 = vsel %vm629, %v1140, %v1142
        %v1147 = vsel %vm629, %v1142, %v1144
        %v1152 = vadd.f32 %v1121, %v1145
        %v1153 = vadd.f32 %v1122, %v1146
        %v1154 = vadd.f32 %v1123, %v1147
        %v1155 = vadd.f32 %v1124, %v1144
        %v1156 = vadd.f32 %v1152, %v729
        %v1157 = vadd.f32 %v1153, %v729
        %v1158 = vadd.f32 %v1154, %v729
        %v1159 = vadd.f32 %v1155, %v729
        %v1160 = vmax.f32 %v1156, 0.0
        %v1161 = vmax.f32 %v1157, 0.0
        %v1162 = vmax.f32 %v1158, 0.0
        %v1163 = vmax.f32 %v1159, 0.0
        %1168 = vrot.lane.b32.xlu0 %v1160, 127
        %v1169 = vpop.permute.xlu0 %1168
        %1170 = vrot.lane.b32.xlu0 %v1161, 127
        %v1171 = vpop.permute.xlu0 %1170
        %1172 = vrot.lane.b32.xlu0 %v1162, 127
        %v1173 = vpop.permute.xlu0 %1172
        %1174 = vrot.lane.b32.xlu0 %v1163, 127
        %v1175 = vpop.permute.xlu0 %1174
        %v1176 = vsel %vm368, %v1169, %v1171
        %v1177 = vsel %vm368, %v1171, %v1173
        %v1178 = vsel %vm368, %v1173, %v1175
        %1182 = vst [vmem:[%s186 + $0x18] sm:$0xff] %v1176
        %1183 = vst [vmem:[%s186 + $0x20] sm:$0xff] %v1177
        %1184 = vst [vmem:[%s186 + $0x28] sm:$0xff] %v1178
        %1185 = vset.pattern.permute.xlu0 32
        %1186 = vperm.xlu0 %1185, %v187
        %v1187 = vpop.permute.xlu0 %1186
        %v1189 = vmul.f32 %v1187, %v216
        %v1190 = vmul.f32 %v1187, %v220
        %v1191 = vmul.f32 %v1187, %v224
        %v1192 = vmul.f32 %v1187, %v351
        %1193 = vset.pattern.permute.xlu0 33
        %1194 = vperm.xlu0 %1193, %v187
        %v1195 = vpop.permute.xlu0 %1194
        %v1197 = vmul.f32 %v1195, %v250
        %v1198 = vmul.f32 %v1195, %v254
        %v1199 = vmul.f32 %v1195, %v258
        %v1200 = vmul.f32 %v1195, %v390
        %v1201 = vadd.f32 %v1189, %v1197
        %v1202 = vadd.f32 %v1190, %v1198
        %v1203 = vadd.f32 %v1191, %v1199
        %v1204 = vadd.f32 %v1192, %v1200
        %1205 = vset.pattern.permute.xlu0 34
        %1206 = vperm.xlu0 %1205, %v187
        %v1207 = vpop.permute.xlu0 %1206
        %v1209 = vmul.f32 %v1207, %v287
        %v1210 = vmul.f32 %v1207, %v291
        %v1211 = vmul.f32 %v1207, %v295
        %v1212 = vmul.f32 %v1207, %v428
        %v1213 = vadd.f32 %v1201, %v1209
        %v1214 = vadd.f32 %v1202, %v1210
        %v1215 = vadd.f32 %v1203, %v1211
        %v1216 = vadd.f32 %v1204, %v1212
        %1217 = vset.pattern.permute.xlu0 35
        %1218 = vperm.xlu0 %1217, %v187
        %v1219 = vpop.permute.xlu0 %1218
        %v1221 = vmul.f32 %v1219, %v324
        %v1222 = vmul.f32 %v1219, %v328
        %v1223 = vmul.f32 %v1219, %v332
        %v1224 = vmul.f32 %v1219, %v466
        %v1225 = vadd.f32 %v1213, %v1221
        %v1226 = vadd.f32 %v1214, %v1222
        %v1227 = vadd.f32 %v1215, %v1223
        %v1228 = vadd.f32 %v1216, %v1224
        %1229 = vset.pattern.permute.xlu0 36
        %1230 = vperm.xlu0 %1229, %v187
        %v1231 = vpop.permute.xlu0 %1230
        %v1233 = vmul.f32 %v1231, %v216
        %v1234 = vmul.f32 %v1231, %v220
        %v1235 = vmul.f32 %v1231, %v224
        %v1236 = vmul.f32 %v1231, %v351
        %1241 = vrot.lane.b32.xlu0 %v1233, 127
        %v1242 = vpop.permute.xlu0 %1241
        %1243 = vrot.lane.b32.xlu0 %v1234, 127
        %v1244 = vpop.permute.xlu0 %1243
        %1245 = vrot.lane.b32.xlu0 %v1235, 127
        %v1246 = vpop.permute.xlu0 %1245
        %1247 = vrot.lane.b32.xlu0 %v1236, 127
        %v1248 = vpop.permute.xlu0 %1247
        %v1249 = vsel %vm368, %v1242, %v1244
        %v1250 = vsel %vm368, %v1244, %v1246
        %v1251 = vsel %vm368, %v1246, %v1248
        %v1256 = vadd.f32 %v1225, %v1249
        %v1257 = vadd.f32 %v1226, %v1250
        %v1258 = vadd.f32 %v1227, %v1251
        %v1259 = vadd.f32 %v1228, %v1248
        %1260 = vset.pattern.permute.xlu0 37
        %1261 = vperm.xlu0 %1260, %v187
        %v1262 = vpop.permute.xlu0 %1261
        %v1264 = vmul.f32 %v1262, %v250
        %v1265 = vmul.f32 %v1262, %v254
        %v1266 = vmul.f32 %v1262, %v258
        %v1267 = vmul.f32 %v1262, %v390
        %1272 = vrot.lane.b32.xlu0 %v1264, 127
        %v1273 = vpop.permute.xlu0 %1272
        %1274 = vrot.lane.b32.xlu0 %v1265, 127
        %v1275 = vpop.permute.xlu0 %1274
        %1276 = vrot.lane.b32.xlu0 %v1266, 127
        %v1277 = vpop.permute.xlu0 %1276
        %1278 = vrot.lane.b32.xlu0 %v1267, 127
        %v1279 = vpop.permute.xlu0 %1278
        %v1280 = vsel %vm368, %v1273, %v1275
        %v1281 = vsel %vm368, %v1275, %v1277
        %v1282 = vsel %vm368, %v1277, %v1279
        %v1287 = vadd.f32 %v1256, %v1280
        %v1288 = vadd.f32 %v1257, %v1281
        %v1289 = vadd.f32 %v1258, %v1282
        %v1290 = vadd.f32 %v1259, %v1279
        %1291 = vset.pattern.permute.xlu0 38
        %1292 = vperm.xlu0 %1291, %v187
        %v1293 = vpop.permute.xlu0 %1292
        %v1295 = vmul.f32 %v1293, %v287
        %v1296 = vmul.f32 %v1293, %v291
        %v1297 = vmul.f32 %v1293, %v295
        %v1298 = vmul.f32 %v1293, %v428
        %1303 = vrot.lane.b32.xlu0 %v1295, 127
        %v1304 = vpop.permute.xlu0 %1303
        %1305 = vrot.lane.b32.xlu0 %v1296, 127
        %v1306 = vpop.permute.xlu0 %1305
        %1307 = vrot.lane.b32.xlu0 %v1297, 127
        %v1308 = vpop.permute.xlu0 %1307
        %1309 = vrot.lane.b32.xlu0 %v1298, 127
        %v1310 = vpop.permute.xlu0 %1309
        %v1311 = vsel %vm368, %v1304, %v1306
        %v1312 = vsel %vm368, %v1306, %v1308
        %v1313 = vsel %vm368, %v1308, %v1310
        %v1318 = vadd.f32 %v1287, %v1311
        %v1319 = vadd.f32 %v1288, %v1312
        %v1320 = vadd.f32 %v1289, %v1313
        %v1321 = vadd.f32 %v1290, %v1310
        %1322 = vset.pattern.permute.xlu0 39
        %1323 = vperm.xlu0 %1322, %v187
        %v1324 = vpop.permute.xlu0 %1323
        %v1326 = vmul.f32 %v1324, %v324
        %v1327 = vmul.f32 %v1324, %v328
        %v1328 = vmul.f32 %v1324, %v332
        %v1329 = vmul.f32 %v1324, %v466
        %1334 = vrot.lane.b32.xlu0 %v1326, 127
        %v1335 = vpop.permute.xlu0 %1334
        %1336 = vrot.lane.b32.xlu0 %v1327, 127
        %v1337 = vpop.permute.xlu0 %1336
        %1338 = vrot.lane.b32.xlu0 %v1328, 127
        %v1339 = vpop.permute.xlu0 %1338
        %1340 = vrot.lane.b32.xlu0 %v1329, 127
        %v1341 = vpop.permute.xlu0 %1340
        %v1342 = vsel %vm368, %v1335, %v1337
        %v1343 = vsel %vm368, %v1337, %v1339
        %v1344 = vsel %vm368, %v1339, %v1341
        %v1349 = vadd.f32 %v1318, %v1342
        %v1350 = vadd.f32 %v1319, %v1343
        %v1351 = vadd.f32 %v1320, %v1344
        %v1352 = vadd.f32 %v1321, %v1341
        %1353 = vset.pattern.permute.xlu0 40
        %1354 = vperm.xlu0 %1353, %v187
        %v1355 = vpop.permute.xlu0 %1354
        %v1357 = vmul.f32 %v1355, %v216
        %v1358 = vmul.f32 %v1355, %v220
        %v1359 = vmul.f32 %v1355, %v224
        %v1360 = vmul.f32 %v1355, %v351
        %1365 = vrot.lane.b32.xlu0 %v1357, 110
        %v1366 = vpop.permute.xlu0 %1365
        %1367 = vrot.lane.b32.xlu0 %v1358, 110
        %v1368 = vpop.permute.xlu0 %1367
        %1369 = vrot.lane.b32.xlu0 %v1359, 110
        %v1370 = vpop.permute.xlu0 %1369
        %1371 = vrot.lane.b32.xlu0 %v1360, 110
        %v1372 = vpop.permute.xlu0 %1371
        %v1373 = vsel %vm512, %v1366, %v1368
        %v1374 = vsel %vm512, %v1368, %v1370
        %v1375 = vsel %vm512, %v1370, %v1372
        %v1380 = vadd.f32 %v1349, %v1373
        %v1381 = vadd.f32 %v1350, %v1374
        %v1382 = vadd.f32 %v1351, %v1375
        %v1383 = vadd.f32 %v1352, %v1372
        %1384 = vset.pattern.permute.xlu0 41
        %1385 = vperm.xlu0 %1384, %v187
        %v1386 = vpop.permute.xlu0 %1385
        %v1388 = vmul.f32 %v1386, %v250
        %v1389 = vmul.f32 %v1386, %v254
        %v1390 = vmul.f32 %v1386, %v258
        %v1391 = vmul.f32 %v1386, %v390
        %1396 = vrot.lane.b32.xlu0 %v1388, 110
        %v1397 = vpop.permute.xlu0 %1396
        %1398 = vrot.lane.b32.xlu0 %v1389, 110
        %v1399 = vpop.permute.xlu0 %1398
        %1400 = vrot.lane.b32.xlu0 %v1390, 110
        %v1401 = vpop.permute.xlu0 %1400
        %1402 = vrot.lane.b32.xlu0 %v1391, 110
        %v1403 = vpop.permute.xlu0 %1402
        %v1404 = vsel %vm512, %v1397, %v1399
        %v1405 = vsel %vm512, %v1399, %v1401
        %v1406 = vsel %vm512, %v1401, %v1403
        %v1411 = vadd.f32 %v1380, %v1404
        %v1412 = vadd.f32 %v1381, %v1405
        %v1413 = vadd.f32 %v1382, %v1406
        %v1414 = vadd.f32 %v1383, %v1403
        %1415 = vset.pattern.permute.xlu0 42
        %1416 = vperm.xlu0 %1415, %v187
        %v1417 = vpop.permute.xlu0 %1416
        %v1419 = vmul.f32 %v1417, %v287
        %v1420 = vmul.f32 %v1417, %v291
        %v1421 = vmul.f32 %v1417, %v295
        %v1422 = vmul.f32 %v1417, %v428
        %1427 = vrot.lane.b32.xlu0 %v1419, 110
        %v1428 = vpop.permute.xlu0 %1427
        %1429 = vrot.lane.b32.xlu0 %v1420, 110
        %v1430 = vpop.permute.xlu0 %1429
        %1431 = vrot.lane.b32.xlu0 %v1421, 110
        %v1432 = vpop.permute.xlu0 %1431
        %1433 = vrot.lane.b32.xlu0 %v1422, 110
        %v1434 = vpop.permute.xlu0 %1433
        %v1435 = vsel %vm512, %v1428, %v1430
        %v1436 = vsel %vm512, %v1430, %v1432
        %v1437 = vsel %vm512, %v1432, %v1434
        %v1442 = vadd.f32 %v1411, %v1435
        %v1443 = vadd.f32 %v1412, %v1436
        %v1444 = vadd.f32 %v1413, %v1437
        %v1445 = vadd.f32 %v1414, %v1434
        %1446 = vset.pattern.permute.xlu0 43
        %1447 = vperm.xlu0 %1446, %v187
        %v1448 = vpop.permute.xlu0 %1447
        %v1450 = vmul.f32 %v1448, %v324
        %v1451 = vmul.f32 %v1448, %v328
        %v1452 = vmul.f32 %v1448, %v332
        %v1453 = vmul.f32 %v1448, %v466
        %1458 = vrot.lane.b32.xlu0 %v1450, 110
        %v1459 = vpop.permute.xlu0 %1458
        %1460 = vrot.lane.b32.xlu0 %v1451, 110
        %v1461 = vpop.permute.xlu0 %1460
        %1462 = vrot.lane.b32.xlu0 %v1452, 110
        %v1463 = vpop.permute.xlu0 %1462
        %1464 = vrot.lane.b32.xlu0 %v1453, 110
        %v1465 = vpop.permute.xlu0 %1464
        %v1466 = vsel %vm512, %v1459, %v1461
        %v1467 = vsel %vm512, %v1461, %v1463
        %v1468 = vsel %vm512, %v1463, %v1465
        %v1473 = vadd.f32 %v1442, %v1466
        %v1474 = vadd.f32 %v1443, %v1467
        %v1475 = vadd.f32 %v1444, %v1468
        %v1476 = vadd.f32 %v1445, %v1465
        %1477 = vset.pattern.permute.xlu0 44
        %1478 = vperm.xlu0 %1477, %v187
        %v1479 = vpop.permute.xlu0 %1478
        %v1481 = vmul.f32 %v1479, %v216
        %v1482 = vmul.f32 %v1479, %v220
        %v1483 = vmul.f32 %v1479, %v224
        %v1484 = vmul.f32 %v1479, %v351
        %1489 = vrot.lane.b32.xlu0 %v1481, 109
        %v1490 = vpop.permute.xlu0 %1489
        %1491 = vrot.lane.b32.xlu0 %v1482, 109
        %v1492 = vpop.permute.xlu0 %1491
        %1493 = vrot.lane.b32.xlu0 %v1483, 109
        %v1494 = vpop.permute.xlu0 %1493
        %1495 = vrot.lane.b32.xlu0 %v1484, 109
        %v1496 = vpop.permute.xlu0 %1495
        %v1497 = vsel %vm629, %v1490, %v1492
        %v1498 = vsel %vm629, %v1492, %v1494
        %v1499 = vsel %vm629, %v1494, %v1496
        %v1504 = vadd.f32 %v1473, %v1497
        %v1505 = vadd.f32 %v1474, %v1498
        %v1506 = vadd.f32 %v1475, %v1499
        %v1507 = vadd.f32 %v1476, %v1496
        %1508 = vset.pattern.permute.xlu0 45
        %1509 = vperm.xlu0 %1508, %v187
        %v1510 = vpop.permute.xlu0 %1509
        %v1512 = vmul.f32 %v1510, %v250
        %v1513 = vmul.f32 %v1510, %v254
        %v1514 = vmul.f32 %v1510, %v258
        %v1515 = vmul.f32 %v1510, %v390
        %1520 = vrot.lane.b32.xlu0 %v1512, 109
        %v1521 = vpop.permute.xlu0 %1520
        %1522 = vrot.lane.b32.xlu0 %v1513, 109
        %v1523 = vpop.permute.xlu0 %1522
        %1524 = vrot.lane.b32.xlu0 %v1514, 109
        %v1525 = vpop.permute.xlu0 %1524
        %1526 = vrot.lane.b32.xlu0 %v1515, 109
        %v1527 = vpop.permute.xlu0 %1526
        %v1528 = vsel %vm629, %v1521, %v1523
        %v1529 = vsel %vm629, %v1523, %v1525
        %v1530 = vsel %vm629, %v1525, %v1527
        %v1535 = vadd.f32 %v1504, %v1528
        %v1536 = vadd.f32 %v1505, %v1529
        %v1537 = vadd.f32 %v1506, %v1530
        %v1538 = vadd.f32 %v1507, %v1527
        %1539 = vset.pattern.permute.xlu0 46
        %1540 = vperm.xlu0 %1539, %v187
        %v1541 = vpop.permute.xlu0 %1540
        %v1543 = vmul.f32 %v1541, %v287
        %v1544 = vmul.f32 %v1541, %v291
        %v1545 = vmul.f32 %v1541, %v295
        %v1546 = vmul.f32 %v1541, %v428
        %1551 = vrot.lane.b32.xlu0 %v1543, 109
        %v1552 = vpop.permute.xlu0 %1551
        %1553 = vrot.lane.b32.xlu0 %v1544, 109
        %v1554 = vpop.permute.xlu0 %1553
        %1555 = vrot.lane.b32.xlu0 %v1545, 109
        %v1556 = vpop.permute.xlu0 %1555
        %1557 = vrot.lane.b32.xlu0 %v1546, 109
        %v1558 = vpop.permute.xlu0 %1557
        %v1559 = vsel %vm629, %v1552, %v1554
        %v1560 = vsel %vm629, %v1554, %v1556
        %v1561 = vsel %vm629, %v1556, %v1558
        %v1566 = vadd.f32 %v1535, %v1559
        %v1567 = vadd.f32 %v1536, %v1560
        %v1568 = vadd.f32 %v1537, %v1561
        %v1569 = vadd.f32 %v1538, %v1558
        %1570 = vset.pattern.permute.xlu0 47
        %1571 = vperm.xlu0 %1570, %v187
        %v1572 = vpop.permute.xlu0 %1571
        %v1574 = vmul.f32 %v1572, %v324
        %v1575 = vmul.f32 %v1572, %v328
        %v1576 = vmul.f32 %v1572, %v332
        %v1577 = vmul.f32 %v1572, %v466
        %1582 = vrot.lane.b32.xlu0 %v1574, 109
        %v1583 = vpop.permute.xlu0 %1582
        %1584 = vrot.lane.b32.xlu0 %v1575, 109
        %v1585 = vpop.permute.xlu0 %1584
        %1586 = vrot.lane.b32.xlu0 %v1576, 109
        %v1587 = vpop.permute.xlu0 %1586
        %1588 = vrot.lane.b32.xlu0 %v1577, 109
        %v1589 = vpop.permute.xlu0 %1588
        %v1590 = vsel %vm629, %v1583, %v1585
        %v1591 = vsel %vm629, %v1585, %v1587
        %v1592 = vsel %vm629, %v1587, %v1589
        %v1597 = vadd.f32 %v1566, %v1590
        %v1598 = vadd.f32 %v1567, %v1591
        %v1599 = vadd.f32 %v1568, %v1592
        %v1600 = vadd.f32 %v1569, %v1589
        %v1601 = vadd.f32 %v1597, %v729
        %v1602 = vadd.f32 %v1598, %v729
        %v1603 = vadd.f32 %v1599, %v729
        %v1604 = vadd.f32 %v1600, %v729
        %v1605 = vmax.f32 %v1601, 0.0
        %v1606 = vmax.f32 %v1602, 0.0
        %v1607 = vmax.f32 %v1603, 0.0
        %v1608 = vmax.f32 %v1604, 0.0
        %1613 = vrot.lane.b32.xlu0 %v1605, 110
        %v1614 = vpop.permute.xlu0 %1613
        %1615 = vrot.lane.b32.xlu0 %v1606, 110
        %v1616 = vpop.permute.xlu0 %1615
        %1617 = vrot.lane.b32.xlu0 %v1607, 110
        %v1618 = vpop.permute.xlu0 %1617
        %1619 = vrot.lane.b32.xlu0 %v1608, 110
        %v1620 = vpop.permute.xlu0 %1619
        %v1621 = vsel %vm512, %v1614, %v1616
        %v1622 = vsel %vm512, %v1616, %v1618
        %v1623 = vsel %vm512, %v1618, %v1620
        %1627 = vst [vmem:[%s186 + $0x30] sm:$0xff] %v1621
        %1628 = vst [vmem:[%s186 + $0x38] sm:$0xff] %v1622
        %1629 = vst [vmem:[%s186 + $0x40] sm:$0xff] %v1623
        %1630 = vset.pattern.permute.xlu0 48
        %1631 = vperm.xlu0 %1630, %v187
        %v1632 = vpop.permute.xlu0 %1631
        %v1634 = vmul.f32 %v1632, %v216
        %v1635 = vmul.f32 %v1632, %v220
        %v1636 = vmul.f32 %v1632, %v224
        %v1637 = vmul.f32 %v1632, %v351
        %1638 = vset.pattern.permute.xlu0 49
        %1639 = vperm.xlu0 %1638, %v187
        %v1640 = vpop.permute.xlu0 %1639
        %v1642 = vmul.f32 %v1640, %v250
        %v1643 = vmul.f32 %v1640, %v254
        %v1644 = vmul.f32 %v1640, %v258
        %v1645 = vmul.f32 %v1640, %v390
        %v1646 = vadd.f32 %v1634, %v1642
        %v1647 = vadd.f32 %v1635, %v1643
        %v1648 = vadd.f32 %v1636, %v1644
        %v1649 = vadd.f32 %v1637, %v1645
        %1650 = vset.pattern.permute.xlu0 50
        %1651 = vperm.xlu0 %1650, %v187
        %v1652 = vpop.permute.xlu0 %1651
        %v1654 = vmul.f32 %v1652, %v287
        %v1655 = vmul.f32 %v1652, %v291
        %v1656 = vmul.f32 %v1652, %v295
        %v1657 = vmul.f32 %v1652, %v428
        %v1658 = vadd.f32 %v1646, %v1654
        %v1659 = vadd.f32 %v1647, %v1655
        %v1660 = vadd.f32 %v1648, %v1656
        %v1661 = vadd.f32 %v1649, %v1657
        %1662 = vset.pattern.permute.xlu0 51
        %1663 = vperm.xlu0 %1662, %v187
        %v1664 = vpop.permute.xlu0 %1663
        %v1666 = vmul.f32 %v1664, %v324
        %v1667 = vmul.f32 %v1664, %v328
        %v1668 = vmul.f32 %v1664, %v332
        %v1669 = vmul.f32 %v1664, %v466
        %v1670 = vadd.f32 %v1658, %v1666
        %v1671 = vadd.f32 %v1659, %v1667
        %v1672 = vadd.f32 %v1660, %v1668
        %v1673 = vadd.f32 %v1661, %v1669
        %1674 = vset.pattern.permute.xlu0 52
        %1675 = vperm.xlu0 %1674, %v187
        %v1676 = vpop.permute.xlu0 %1675
        %v1678 = vmul.f32 %v1676, %v216
        %v1679 = vmul.f32 %v1676, %v220
        %v1680 = vmul.f32 %v1676, %v224
        %v1681 = vmul.f32 %v1676, %v351
        %1686 = vrot.lane.b32.xlu0 %v1678, 127
        %v1687 = vpop.permute.xlu0 %1686
        %1688 = vrot.lane.b32.xlu0 %v1679, 127
        %v1689 = vpop.permute.xlu0 %1688
        %1690 = vrot.lane.b32.xlu0 %v1680, 127
        %v1691 = vpop.permute.xlu0 %1690
        %1692 = vrot.lane.b32.xlu0 %v1681, 127
        %v1693 = vpop.permute.xlu0 %1692
        %v1694 = vsel %vm368, %v1687, %v1689
        %v1695 = vsel %vm368, %v1689, %v1691
        %v1696 = vsel %vm368, %v1691, %v1693
        %v1701 = vadd.f32 %v1670, %v1694
        %v1702 = vadd.f32 %v1671, %v1695
        %v1703 = vadd.f32 %v1672, %v1696
        %v1704 = vadd.f32 %v1673, %v1693
        %1705 = vset.pattern.permute.xlu0 53
        %1706 = vperm.xlu0 %1705, %v187
        %v1707 = vpop.permute.xlu0 %1706
        %v1709 = vmul.f32 %v1707, %v250
        %v1710 = vmul.f32 %v1707, %v254
        %v1711 = vmul.f32 %v1707, %v258
        %v1712 = vmul.f32 %v1707, %v390
        %1717 = vrot.lane.b32.xlu0 %v1709, 127
        %v1718 = vpop.permute.xlu0 %1717
        %1719 = vrot.lane.b32.xlu0 %v1710, 127
        %v1720 = vpop.permute.xlu0 %1719
        %1721 = vrot.lane.b32.xlu0 %v1711, 127
        %v1722 = vpop.permute.xlu0 %1721
        %1723 = vrot.lane.b32.xlu0 %v1712, 127
        %v1724 = vpop.permute.xlu0 %1723
        %v1725 = vsel %vm368, %v1718, %v1720
        %v1726 = vsel %vm368, %v1720, %v1722
        %v1727 = vsel %vm368, %v1722, %v1724
        %v1732 = vadd.f32 %v1701, %v1725
        %v1733 = vadd.f32 %v1702, %v1726
        %v1734 = vadd.f32 %v1703, %v1727
        %v1735 = vadd.f32 %v1704, %v1724
        %1736 = vset.pattern.permute.xlu0 54
        %1737 = vperm.xlu0 %1736, %v187
        %v1738 = vpop.permute.xlu0 %1737
        %v1740 = vmul.f32 %v1738, %v287
        %v1741 = vmul.f32 %v1738, %v291
        %v1742 = vmul.f32 %v1738, %v295
        %v1743 = vmul.f32 %v1738, %v428
        %1748 = vrot.lane.b32.xlu0 %v1740, 127
        %v1749 = vpop.permute.xlu0 %1748
        %1750 = vrot.lane.b32.xlu0 %v1741, 127
        %v1751 = vpop.permute.xlu0 %1750
        %1752 = vrot.lane.b32.xlu0 %v1742, 127
        %v1753 = vpop.permute.xlu0 %1752
        %1754 = vrot.lane.b32.xlu0 %v1743, 127
        %v1755 = vpop.permute.xlu0 %1754
        %v1756 = vsel %vm368, %v1749, %v1751
        %v1757 = vsel %vm368, %v1751, %v1753
        %v1758 = vsel %vm368, %v1753, %v1755
        %v1763 = vadd.f32 %v1732, %v1756
        %v1764 = vadd.f32 %v1733, %v1757
        %v1765 = vadd.f32 %v1734, %v1758
        %v1766 = vadd.f32 %v1735, %v1755
        %1767 = vset.pattern.permute.xlu0 55
        %1768 = vperm.xlu0 %1767, %v187
        %v1769 = vpop.permute.xlu0 %1768
        %v1771 = vmul.f32 %v1769, %v324
        %v1772 = vmul.f32 %v1769, %v328
        %v1773 = vmul.f32 %v1769, %v332
        %v1774 = vmul.f32 %v1769, %v466
        %1779 = vrot.lane.b32.xlu0 %v1771, 127
        %v1780 = vpop.permute.xlu0 %1779
        %1781 = vrot.lane.b32.xlu0 %v1772, 127
        %v1782 = vpop.permute.xlu0 %1781
        %1783 = vrot.lane.b32.xlu0 %v1773, 127
        %v1784 = vpop.permute.xlu0 %1783
        %1785 = vrot.lane.b32.xlu0 %v1774, 127
        %v1786 = vpop.permute.xlu0 %1785
        %v1787 = vsel %vm368, %v1780, %v1782
        %v1788 = vsel %vm368, %v1782, %v1784
        %v1789 = vsel %vm368, %v1784, %v1786
        %v1794 = vadd.f32 %v1763, %v1787
        %v1795 = vadd.f32 %v1764, %v1788
        %v1796 = vadd.f32 %v1765, %v1789
        %v1797 = vadd.f32 %v1766, %v1786
        %1798 = vset.pattern.permute.xlu0 56
        %1799 = vperm.xlu0 %1798, %v187
        %v1800 = vpop.permute.xlu0 %1799
        %v1802 = vmul.f32 %v1800, %v216
        %v1803 = vmul.f32 %v1800, %v220
        %v1804 = vmul.f32 %v1800, %v224
        %v1805 = vmul.f32 %v1800, %v351
        %1810 = vrot.lane.b32.xlu0 %v1802, 110
        %v1811 = vpop.permute.xlu0 %1810
        %1812 = vrot.lane.b32.xlu0 %v1803, 110
        %v1813 = vpop.permute.xlu0 %1812
        %1814 = vrot.lane.b32.xlu0 %v1804, 110
        %v1815 = vpop.permute.xlu0 %1814
        %1816 = vrot.lane.b32.xlu0 %v1805, 110
        %v1817 = vpop.permute.xlu0 %1816
        %v1818 = vsel %vm512, %v1811, %v1813
        %v1819 = vsel %vm512, %v1813, %v1815
        %v1820 = vsel %vm512, %v1815, %v1817
        %v1825 = vadd.f32 %v1794, %v1818
        %v1826 = vadd.f32 %v1795, %v1819
        %v1827 = vadd.f32 %v1796, %v1820
        %v1828 = vadd.f32 %v1797, %v1817
        %1829 = vset.pattern.permute.xlu0 57
        %1830 = vperm.xlu0 %1829, %v187
        %v1831 = vpop.permute.xlu0 %1830
        %v1833 = vmul.f32 %v1831, %v250
        %v1834 = vmul.f32 %v1831, %v254
        %v1835 = vmul.f32 %v1831, %v258
        %v1836 = vmul.f32 %v1831, %v390
        %1841 = vrot.lane.b32.xlu0 %v1833, 110
        %v1842 = vpop.permute.xlu0 %1841
        %1843 = vrot.lane.b32.xlu0 %v1834, 110
        %v1844 = vpop.permute.xlu0 %1843
        %1845 = vrot.lane.b32.xlu0 %v1835, 110
        %v1846 = vpop.permute.xlu0 %1845
        %1847 = vrot.lane.b32.xlu0 %v1836, 110
        %v1848 = vpop.permute.xlu0 %1847
        %v1849 = vsel %vm512, %v1842, %v1844
        %v1850 = vsel %vm512, %v1844, %v1846
        %v1851 = vsel %vm512, %v1846, %v1848
        %v1856 = vadd.f32 %v1825, %v1849
        %v1857 = vadd.f32 %v1826, %v1850
        %v1858 = vadd.f32 %v1827, %v1851
        %v1859 = vadd.f32 %v1828, %v1848
        %1860 = vset.pattern.permute.xlu0 58
        %1861 = vperm.xlu0 %1860, %v187
        %v1862 = vpop.permute.xlu0 %1861
        %v1864 = vmul.f32 %v1862, %v287
        %v1865 = vmul.f32 %v1862, %v291
        %v1866 = vmul.f32 %v1862, %v295
        %v1867 = vmul.f32 %v1862, %v428
        %1872 = vrot.lane.b32.xlu0 %v1864, 110
        %v1873 = vpop.permute.xlu0 %1872
        %1874 = vrot.lane.b32.xlu0 %v1865, 110
        %v1875 = vpop.permute.xlu0 %1874
        %1876 = vrot.lane.b32.xlu0 %v1866, 110
        %v1877 = vpop.permute.xlu0 %1876
        %1878 = vrot.lane.b32.xlu0 %v1867, 110
        %v1879 = vpop.permute.xlu0 %1878
        %v1880 = vsel %vm512, %v1873, %v1875
        %v1881 = vsel %vm512, %v1875, %v1877
        %v1882 = vsel %vm512, %v1877, %v1879
        %v1887 = vadd.f32 %v1856, %v1880
        %v1888 = vadd.f32 %v1857, %v1881
        %v1889 = vadd.f32 %v1858, %v1882
        %v1890 = vadd.f32 %v1859, %v1879
        %1891 = vset.pattern.permute.xlu0 59
        %1892 = vperm.xlu0 %1891, %v187
        %v1893 = vpop.permute.xlu0 %1892
        %v1895 = vmul.f32 %v1893, %v324
        %v1896 = vmul.f32 %v1893, %v328
        %v1897 = vmul.f32 %v1893, %v332
        %v1898 = vmul.f32 %v1893, %v466
        %1903 = vrot.lane.b32.xlu0 %v1895, 110
        %v1904 = vpop.permute.xlu0 %1903
        %1905 = vrot.lane.b32.xlu0 %v1896, 110
        %v1906 = vpop.permute.xlu0 %1905
        %1907 = vrot.lane.b32.xlu0 %v1897, 110
        %v1908 = vpop.permute.xlu0 %1907
        %1909 = vrot.lane.b32.xlu0 %v1898, 110
        %v1910 = vpop.permute.xlu0 %1909
        %v1911 = vsel %vm512, %v1904, %v1906
        %v1912 = vsel %vm512, %v1906, %v1908
        %v1913 = vsel %vm512, %v1908, %v1910
        %v1918 = vadd.f32 %v1887, %v1911
        %v1919 = vadd.f32 %v1888, %v1912
        %v1920 = vadd.f32 %v1889, %v1913
        %v1921 = vadd.f32 %v1890, %v1910
        %1922 = vset.pattern.permute.xlu0 60
        %1923 = vperm.xlu0 %1922, %v187
        %v1924 = vpop.permute.xlu0 %1923
        %v1926 = vmul.f32 %v1924, %v216
        %v1927 = vmul.f32 %v1924, %v220
        %v1928 = vmul.f32 %v1924, %v224
        %v1929 = vmul.f32 %v1924, %v351
        %1934 = vrot.lane.b32.xlu0 %v1926, 109
        %v1935 = vpop.permute.xlu0 %1934
        %1936 = vrot.lane.b32.xlu0 %v1927, 109
        %v1937 = vpop.permute.xlu0 %1936
        %1938 = vrot.lane.b32.xlu0 %v1928, 109
        %v1939 = vpop.permute.xlu0 %1938
        %1940 = vrot.lane.b32.xlu0 %v1929, 109
        %v1941 = vpop.permute.xlu0 %1940
        %v1942 = vsel %vm629, %v1935, %v1937
        %v1943 = vsel %vm629, %v1937, %v1939
        %v1944 = vsel %vm629, %v1939, %v1941
        %v1949 = vadd.f32 %v1918, %v1942
        %v1950 = vadd.f32 %v1919, %v1943
        %v1951 = vadd.f32 %v1920, %v1944
        %v1952 = vadd.f32 %v1921, %v1941
        %1953 = vset.pattern.permute.xlu0 61
        %1954 = vperm.xlu0 %1953, %v187
        %v1955 = vpop.permute.xlu0 %1954
        %v1957 = vmul.f32 %v1955, %v250
        %v1958 = vmul.f32 %v1955, %v254
        %v1959 = vmul.f32 %v1955, %v258
        %v1960 = vmul.f32 %v1955, %v390
        %1965 = vrot.lane.b32.xlu0 %v1957, 109
        %v1966 = vpop.permute.xlu0 %1965
        %1967 = vrot.lane.b32.xlu0 %v1958, 109
        %v1968 = vpop.permute.xlu0 %1967
        %1969 = vrot.lane.b32.xlu0 %v1959, 109
        %v1970 = vpop.permute.xlu0 %1969
        %1971 = vrot.lane.b32.xlu0 %v1960, 109
        %v1972 = vpop.permute.xlu0 %1971
        %v1973 = vsel %vm629, %v1966, %v1968
        %v1974 = vsel %vm629, %v1968, %v1970
        %v1975 = vsel %vm629, %v1970, %v1972
        %v1980 = vadd.f32 %v1949, %v1973
        %v1981 = vadd.f32 %v1950, %v1974
        %v1982 = vadd.f32 %v1951, %v1975
        %v1983 = vadd.f32 %v1952, %v1972
        %1984 = vset.pattern.permute.xlu0 62
        %1985 = vperm.xlu0 %1984, %v187
        %v1986 = vpop.permute.xlu0 %1985
        %v1988 = vmul.f32 %v1986, %v287
        %v1989 = vmul.f32 %v1986, %v291
        %v1990 = vmul.f32 %v1986, %v295
        %v1991 = vmul.f32 %v1986, %v428
        %1996 = vrot.lane.b32.xlu0 %v1988, 109
        %v1997 = vpop.permute.xlu0 %1996
        %1998 = vrot.lane.b32.xlu0 %v1989, 109
        %v1999 = vpop.permute.xlu0 %1998
        %2000 = vrot.lane.b32.xlu0 %v1990, 109
        %v2001 = vpop.permute.xlu0 %2000
        %2002 = vrot.lane.b32.xlu0 %v1991, 109
        %v2003 = vpop.permute.xlu0 %2002
        %v2004 = vsel %vm629, %v1997, %v1999
        %v2005 = vsel %vm629, %v1999, %v2001
        %v2006 = vsel %vm629, %v2001, %v2003
        %v2011 = vadd.f32 %v1980, %v2004
        %v2012 = vadd.f32 %v1981, %v2005
        %v2013 = vadd.f32 %v1982, %v2006
        %v2014 = vadd.f32 %v1983, %v2003
        %2015 = vset.pattern.permute.xlu0 63
        %2016 = vperm.xlu0 %2015, %v187
        %v2017 = vpop.permute.xlu0 %2016
        %v2019 = vmul.f32 %v2017, %v324
        %v2020 = vmul.f32 %v2017, %v328
        %v2021 = vmul.f32 %v2017, %v332
        %v2022 = vmul.f32 %v2017, %v466
        %2027 = vrot.lane.b32.xlu0 %v2019, 109
        %v2028 = vpop.permute.xlu0 %2027
        %2029 = vrot.lane.b32.xlu0 %v2020, 109
        %v2030 = vpop.permute.xlu0 %2029
        %2031 = vrot.lane.b32.xlu0 %v2021, 109
        %v2032 = vpop.permute.xlu0 %2031
        %2033 = vrot.lane.b32.xlu0 %v2022, 109
        %v2034 = vpop.permute.xlu0 %2033
        %v2035 = vsel %vm629, %v2028, %v2030
        %v2036 = vsel %vm629, %v2030, %v2032
        %v2037 = vsel %vm629, %v2032, %v2034
        %v2042 = vadd.f32 %v2011, %v2035
        %v2043 = vadd.f32 %v2012, %v2036
        %v2044 = vadd.f32 %v2013, %v2037
        %v2045 = vadd.f32 %v2014, %v2034
        %v2046 = vadd.f32 %v2042, %v729
        %v2047 = vadd.f32 %v2043, %v729
        %v2048 = vadd.f32 %v2044, %v729
        %v2049 = vadd.f32 %v2045, %v729
        %v2050 = vmax.f32 %v2046, 0.0
        %v2051 = vmax.f32 %v2047, 0.0
        %v2052 = vmax.f32 %v2048, 0.0
        %v2053 = vmax.f32 %v2049, 0.0
        %2058 = vrot.lane.b32.xlu0 %v2050, 109
        %v2059 = vpop.permute.xlu0 %2058
        %2060 = vrot.lane.b32.xlu0 %v2051, 109
        %v2061 = vpop.permute.xlu0 %2060
        %2062 = vrot.lane.b32.xlu0 %v2052, 109
        %v2063 = vpop.permute.xlu0 %2062
        %2064 = vrot.lane.b32.xlu0 %v2053, 109
        %v2065 = vpop.permute.xlu0 %2064
        %v2066 = vsel %vm629, %v2059, %v2061
        %v2067 = vsel %vm629, %v2061, %v2063
        %v2068 = vsel %vm629, %v2063, %v2065
        %2072 = vst [vmem:[%s186 + $0x48] sm:$0xff] %v2066
        %2073 = vst [vmem:[%s186 + $0x50] sm:$0xff] %v2067
        %2074 = vst [vmem:[%s186 + $0x58] sm:$0xff] %v2068
        %s2075 = sand.u32 %s96, 1
        %s2076 = scalar_lea.sflag [#allocation4], %s2075
        %s2077 = sand.u32 %s96, 1
        %s2078 = smul.addr %s2077, 96
        %s2079 = scalar_lea.vmem [#allocation5], %s2078
        // Predicated region
        $region37: #{tpu_custom_call.1} parent=31 // pred_check
          %p2080 = pneg %p106
        $region38: #{tpu_custom_call.1} parent=31 // pred_check_branch
          %2082 = sbr.rel (%p2080) target = $region40
        $region39: #{tpu_custom_call.1} parent=31 // pred_region
          %s2084 = ssub.s32 1536, 1536
          %2085 = vsyncadd %s2076, %s2084
          %s2086 = smul.addr %s20, 12
          %s2087 = smul.addr %s2086, 128
          %s2088 = scalar_lea.hbm %s3, %s2087
          %s2089 = sshll.u32 %s2079, 4
          %s2090 = int_to_ptr.vmem [resolvable:$true] %s2089
          %2095 = dma.vmem_to_hbm [thread:$0]  %s2090, 1536, %s2088, %s2076, 384, 384, 24
        $region40: #{tpu_custom_call.1} parent=31 // pred_fallthru
          _
      $region32: #{tpu_custom_call.1} parent=5 // pred_fallthru
        _
      %p2096 = scmp.le.s32.totalorder 2, %s15
      // Predicated region
      $region41: #{tpu_custom_call.1} parent=5 // pred_check
        %p2097 = pneg %p2096
      $region42: #{tpu_custom_call.1} parent=5 // pred_check_branch
        %2099 = sbr.rel (%p2097) target = $region44
      $region43: #{tpu_custom_call.1} parent=5 // pred_region
        %s2100 = ssub.s32 %s15, 2
        // Predicated region
        $region45: #{tpu_custom_call.1} parent=43 // pred_check
          %p2101 = pneg %p112
        $region46: #{tpu_custom_call.1} parent=43 // pred_check_branch
          %2103 = sbr.rel (%p2101) target = $region48
        $region47: #{tpu_custom_call.1} parent=43 // pred_region
          %s2104 = sand.u32 %s97, 1
          %s2105 = scalar_lea.sflag [#allocation4], %s2104
          %s2106 = sand.u32 %s97, 1
          %s2107 = smul.addr %s2106, 96
          %s2108 = scalar_lea.vmem [#allocation5], %s2107
          %2109 = dma.done %s2105, 1536
        $region48: #{tpu_custom_call.1} parent=43 // pred_fallthru
          _
      $region44: #{tpu_custom_call.1} parent=5 // pred_fallthru
        _
    $region6: #{tpu_custom_call.1} parent=1 // loop_footer
      %s19 = sadd.s32 1, %s15
    $region7: #{tpu_custom_call.1} parent=1 // loop_footer_branch
      %14 = sbr.rel target = $region3
    $region8: #{tpu_custom_call.1} parent=1 // loop_exit
      _
    %2110 = vsyncpa [#allocation3], 1
    %s2111 = scalar_lea.sflag [#allocation3], 1
    %2112 = vsyncpa %s2111, 1
    %2113 = vsyncpa [#allocation4], 1
    %s2114 = scalar_lea.sflag [#allocation4], 1
    %2115 = vsyncpa %s2114, 1

</llo_original>
